<compile_context>
chip_gen: v7x
topology: tpu7x:2x2x1
jax: 0.10.0
libtpu: 0.0.40
codegen_flags: <defaults>
</compile_context>

<pallas_src>
import jax
import jax.numpy as jnp
from jax.experimental import pallas as pl
from jax.experimental.pallas import tpu as pltpu

D_MODEL = 32
D_FFN = 64
NUM_HEADS = 4
HEAD_DIM = D_MODEL // NUM_HEADS
EPS = 1e-5


def _layer_norm(x, gamma, beta):
    # x: (N, D), gamma/beta: (1, D)
    mean = jnp.mean(x, axis=-1, keepdims=True)
    var = jnp.mean((x - mean) ** 2, axis=-1, keepdims=True)
    return (x - mean) * jax.lax.rsqrt(var + EPS) * gamma + beta


def encoder_block_kernel(
    x_ref, mask_ref,
    ln_ref, wqkv_ref, bqkv_ref, wo_ref, bo_ref,
    w1_ref, b1_ref, w2_ref, b2_ref,
    out_ref, attn_ref,
):
    bt, S, D = x_ref.shape
    H, hd = NUM_HEADS, HEAD_DIM
    N = bt * S

    x3 = x_ref[...]                       # (bt, S, D)
    x = x3.reshape(N, D)                  # flatten batch*seq into sublanes
    mask = mask_ref[...]                  # (bt, 1, S)

    ln = ln_ref[...]                      # (4, D): [g1, be1, g2, be2]
    g1, be1 = ln[0:1, :], ln[1:2, :]
    g2, be2 = ln[2:3, :], ln[3:4, :]

    # ---- LayerNorm 1 (pre-attention) ----
    xn = _layer_norm(x, g1, be1)

    # ---- Fused QKV projection: one MXU push with N=3D ----
    qkv = jnp.dot(xn, wqkv_ref[...], preferred_element_type=jnp.float32) + bqkv_ref[...]
    scale = 1.0 / jnp.sqrt(jnp.float32(hd))
    q = qkv[:, :D] * scale                # fold softmax scale into q once
    k = qkv[:, D:2 * D]
    v = qkv[:, 2 * D:]

    q3 = q.reshape(bt, S, D)
    k3 = k.reshape(bt, S, D)
    v3 = v.reshape(bt, S, D)

    bias = (mask - 1.0) * 1e9             # (bt, 1, S): 0 keep, -1e9 padded

    # ---- Multi-head self-attention (batched over batch dim per head) ----
    # TODO(synk): for large S, add KV tiling (flash-style online softmax) so the
    # (S, S) score tensors never exceed VMEM.
    ctx_heads = []
    p_heads = []
    for h in range(H):                    # static, unrolled
        lo = h * hd
        q_h = q3[:, :, lo:lo + hd]        # (bt, S, hd)
        k_h = k3[:, :, lo:lo + hd]
        v_h = v3[:, :, lo:lo + hd]
        s_h = jnp.einsum("bqd,bkd->bqk", q_h, k_h,
                         preferred_element_type=jnp.float32)     # (bt, S, S)
        s_h = s_h + bias
        s_h = s_h - jnp.max(s_h, axis=-1, keepdims=True)
        e_h = jnp.exp(s_h)
        inv = pl.reciprocal(jnp.sum(e_h, axis=-1, keepdims=True), approx=True)
        p_h = e_h * inv                                           # softmax
        p_heads.append(p_h)
        ctx_heads.append(jnp.einsum("bqk,bkd->bqd", p_h, v_h,
                                    preferred_element_type=jnp.float32))

    # Single output projection on concatenated contexts (one K=D matmul).
    ctx = jnp.concatenate(ctx_heads, axis=-1).reshape(N, D)       # (N, D)
    attn_out = jnp.dot(ctx, wo_ref[...],
                       preferred_element_type=jnp.float32) + bo_ref[...]

    # dropout1 is identity (eval mode)
    x1 = x + attn_out

    # ---- LayerNorm 2 + FFN ----
    xn2 = _layer_norm(x1, g2, be2)
    hid = jnp.dot(xn2, w1_ref[...], preferred_element_type=jnp.float32) + b1_ref[...]
    hid = jnp.maximum(hid, 0.0)                                   # ReLU
    ffn = jnp.dot(hid, w2_ref[...], preferred_element_type=jnp.float32) + b2_ref[...]

    # dropout2 is identity (eval mode)
    out_ref[...] = x1 + ffn                                       # single store

    # Attention probs: (bt,S,S) per head -> (N, S), concat heads along lanes.
    attn_ref[...] = jnp.concatenate([p.reshape(N, S) for p in p_heads], axis=-1)


def encoder_block(x, pad_mask, params, num_batch_blocks=1):
    """num_batch_blocks=1 collapses the grid (best for v5e/v6e); use 2 on v7x to
    engage both TensorCores."""
    B, S, D = x.shape
    H = NUM_HEADS
    assert B % num_batch_blocks == 0
    bt = B // num_batch_blocks

    # ---- Host-side parameter fusion (cuts kernel args 16 -> 9) ----
    ln_gb = jnp.concatenate(
        [params["g1"], params["be1"], params["g2"], params["be2"]], axis=0)   # (4, D)
    wqkv = jnp.concatenate([params["wq"], params["wk"], params["wv"]], axis=1)  # (D, 3D)
    bqkv = jnp.concatenate([params["bq"], params["bk"], params["bv"]], axis=1)  # (1, 3D)

    param_args = [ln_gb, wqkv, bqkv, params["wo"], params["bo"],
                  params["w1"], params["b1"], params["w2"], params["b2"]]

    def rep_spec(shape):
        nd = len(shape)
        return pl.BlockSpec(shape, lambda i, _nd=nd: (0,) * _nd)

    in_specs = [
        pl.BlockSpec((bt, S, D), lambda i: (i, 0, 0)),     # x
        pl.BlockSpec((bt, 1, S), lambda i: (i, 0, 0)),     # pad_mask
    ] + [rep_spec(p.shape) for p in param_args]            # weights: whole, replicated

    out_specs = [
        pl.BlockSpec((bt * S, D), lambda i: (i, 0)),       # y, flattened (B*S, D)
        pl.BlockSpec((bt * S, H * S), lambda i: (i, 0)),   # attn, flattened (B*S, H*S)
    ]

    out_flat, attn_flat = pl.pallas_call(
        encoder_block_kernel,
        out_shape=(
            jax.ShapeDtypeStruct((B * S, D), jnp.float32),
            jax.ShapeDtypeStruct((B * S, H * S), jnp.float32),
        ),
        grid_spec=pltpu.PrefetchScalarGridSpec(
            num_scalar_prefetch=0,
            grid=(num_batch_blocks,),
            in_specs=in_specs,
            out_specs=out_specs,
        ),
        compiler_params=pltpu.CompilerParams(
            dimension_semantics=("parallel",),
        ),
    )(x, pad_mask, *param_args)

    out = out_flat.reshape(B, S, D)
    attn = attn_flat.reshape(B, S, H, S).transpose(0, 2, 1, 3)   # (B, H, S, S)
    return out, attn


def reference(x, pad_mask, p):
    """Pure-JAX reference of the same forward pass."""
    B, S, D = x.shape
    H, hd = NUM_HEADS, HEAD_DIM

    def ln(t, g, b):
        m = t.mean(-1, keepdims=True)
        v = ((t - m) ** 2).mean(-1, keepdims=True)
        return (t - m) / jnp.sqrt(v + EPS) * g + b

    xn = ln(x, p["g1"], p["be1"])
    q = xn @ p["wq"] + p["bq"]
    k = xn @ p["wk"] + p["bk"]
    v = xn @ p["wv"] + p["bv"]
    qh = q.reshape(B, S, H, hd).transpose(0, 2, 1, 3)
    kh = k.reshape(B, S, H, hd).transpose(0, 2, 1, 3)
    vh = v.reshape(B, S, H, hd).transpose(0, 2, 1, 3)
    s = jnp.einsum("bhqd,bhkd->bhqk", qh, kh) / jnp.sqrt(jnp.float32(hd))
    s = s + (pad_mask[:, None, :, :] - 1.0) * 1e9
    attn = jax.nn.softmax(s, axis=-1)
    ctx = jnp.einsum("bhqk,bhkd->bhqd", attn, vh)
    ctx = ctx.transpose(0, 2, 1, 3).reshape(B, S, D)
    x1 = x + (ctx @ p["wo"] + p["bo"])
    xn2 = ln(x1, p["g2"], p["be2"])
    hid = jnp.maximum(xn2 @ p["w1"] + p["b1"], 0.0)
    out = x1 + (hid @ p["w2"] + p["b2"])
    return out, attn


def make_params(key):
    ks = jax.random.split(key, 8)
    s = 0.05
    return {
        "g1": jnp.ones((1, D_MODEL), jnp.float32),
        "be1": jnp.zeros((1, D_MODEL), jnp.float32),
        "wq": s * jax.random.normal(ks[0], (D_MODEL, D_MODEL), jnp.float32),
        "bq": jnp.zeros((1, D_MODEL), jnp.float32),
        "wk": s * jax.random.normal(ks[1], (D_MODEL, D_MODEL), jnp.float32),
        "bk": jnp.zeros((1, D_MODEL), jnp.float32),
        "wv": s * jax.random.normal(ks[2], (D_MODEL, D_MODEL), jnp.float32),
        "bv": jnp.zeros((1, D_MODEL), jnp.float32),
        "wo": s * jax.random.normal(ks[3], (D_MODEL, D_MODEL), jnp.float32),
        "bo": jnp.zeros((1, D_MODEL), jnp.float32),
        "g2": jnp.ones((1, D_MODEL), jnp.float32),
        "be2": jnp.zeros((1, D_MODEL), jnp.float32),
        "w1": s * jax.random.normal(ks[4], (D_MODEL, D_FFN), jnp.float32),
        "b1": jnp.zeros((1, D_FFN), jnp.float32),
        "w2": s * jax.random.normal(ks[5], (D_FFN, D_MODEL), jnp.float32),
        "b2": jnp.zeros((1, D_MODEL), jnp.float32),
    }


if __name__ == "__main__":
    B, S = 2, 8
    key = jax.random.PRNGKey(0)
    kx, kp = jax.random.split(key)

    x = jax.random.normal(kx, (B, S, D_MODEL), jnp.float32)
    pad_mask = jnp.ones((B, 1, S), jnp.float32)
    pad_mask = pad_mask.at[1, :, 6:].set(0.0)   # last 2 positions of batch 1 are padding

    params = make_params(kp)

    out, attn = encoder_block(x, pad_mask, params)
    out, attn = jax.block_until_ready((out, attn))

    ref_out, ref_attn = reference(x, pad_mask, params)
    assert out.shape == (B, S, D_MODEL) and attn.shape == (B, NUM_HEADS, S, S)
    assert jnp.allclose(out, ref_out, atol=1e-3, rtol=1e-3)
    assert jnp.allclose(attn, ref_attn, atol=1e-3, rtol=1e-3)

    print("KERNEL_OK")
</pallas_src>

<mosaic_0001>
module attributes {stable_mosaic.version = 11 : i64} {
  func.func @encoder_block_kernel(%arg0: i32, %arg1: memref<2x8x32xf32, #tpu.memory_space<vmem>>, %arg2: memref<2x1x8xf32, #tpu.memory_space<vmem>>, %arg3: memref<4x32xf32, #tpu.memory_space<vmem>>, %arg4: memref<32x96xf32, #tpu.memory_space<vmem>>, %arg5: memref<1x96xf32, #tpu.memory_space<vmem>>, %arg6: memref<32x32xf32, #tpu.memory_space<vmem>>, %arg7: memref<1x32xf32, #tpu.memory_space<vmem>>, %arg8: memref<32x64xf32, #tpu.memory_space<vmem>>, %arg9: memref<1x64xf32, #tpu.memory_space<vmem>>, %arg10: memref<64x32xf32, #tpu.memory_space<vmem>>, %arg11: memref<1x32xf32, #tpu.memory_space<vmem>>, %arg12: memref<16x32xf32, #tpu.memory_space<vmem>>, %arg13: memref<16x32xf32, #tpu.memory_space<vmem>>) attributes {dimension_semantics = [#tpu.dimension_semantics<parallel>], iteration_bounds = array<i64: 1>, scalar_prefetch = 0 : i64, scratch_operands = 0 : i64, tpu.core_type = #tpu.core_type<tc>, window_params = [{transform_indices = @transform_0, window_bounds = array<i64: 2, 8, 32>}, {transform_indices = @transform_1, window_bounds = array<i64: 2, 1, 8>}, {pipeline_mode = #tpu.pipeline_mode<synchronous>, transform_indices = @transform_2, window_bounds = array<i64: 4, 32>}, {pipeline_mode = #tpu.pipeline_mode<synchronous>, transform_indices = @transform_3, window_bounds = array<i64: 32, 96>}, {pipeline_mode = #tpu.pipeline_mode<synchronous>, transform_indices = @transform_4, window_bounds = array<i64: 1, 96>}, {pipeline_mode = #tpu.pipeline_mode<synchronous>, transform_indices = @transform_5, window_bounds = array<i64: 32, 32>}, {pipeline_mode = #tpu.pipeline_mode<synchronous>, transform_indices = @transform_6, window_bounds = array<i64: 1, 32>}, {pipeline_mode = #tpu.pipeline_mode<synchronous>, transform_indices = @transform_7, window_bounds = array<i64: 32, 64>}, {pipeline_mode = #tpu.pipeline_mode<synchronous>, transform_indices = @transform_8, window_bounds = array<i64: 1, 64>}, {pipeline_mode = #tpu.pipeline_mode<synchronous>, transform_indices = @transform_9, window_bounds = array<i64: 64, 32>}, {pipeline_mode = #tpu.pipeline_mode<synchronous>, transform_indices = @transform_10, window_bounds = array<i64: 1, 32>}, {transform_indices = @transform_11, window_bounds = array<i64: 16, 32>}, {transform_indices = @transform_12, window_bounds = array<i64: 16, 32>}]} {
    %c0 = arith.constant 0 : index
    %c0_0 = arith.constant 0 : index
    %c0_1 = arith.constant 0 : index
    %0 = vector.load %arg1[%c0, %c0_0, %c0_1] : memref<2x8x32xf32, #tpu.memory_space<vmem>>, vector<2x8x32xf32>
    %1 = vector.shape_cast %0 : vector<2x8x32xf32> to vector<16x32xf32>
    %c0_2 = arith.constant 0 : index
    %c0_3 = arith.constant 0 : index
    %c0_4 = arith.constant 0 : index
    %2 = vector.load %arg2[%c0_2, %c0_3, %c0_4] : memref<2x1x8xf32, #tpu.memory_space<vmem>>, vector<2x1x8xf32>
    %c0_5 = arith.constant 0 : index
    %c0_6 = arith.constant 0 : index
    %3 = vector.load %arg3[%c0_5, %c0_6] : memref<4x32xf32, #tpu.memory_space<vmem>>, vector<4x32xf32>
    %4 = vector.extract_strided_slice %3 {offsets = [0, 0], sizes = [1, 32], strides = [1, 1]} : vector<4x32xf32> to vector<1x32xf32>
    %5 = vector.extract_strided_slice %3 {offsets = [1, 0], sizes = [1, 32], strides = [1, 1]} : vector<4x32xf32> to vector<1x32xf32>
    %6 = vector.extract_strided_slice %3 {offsets = [2, 0], sizes = [1, 32], strides = [1, 1]} : vector<4x32xf32> to vector<1x32xf32>
    %7 = vector.extract_strided_slice %3 {offsets = [3, 0], sizes = [1, 32], strides = [1, 1]} : vector<4x32xf32> to vector<1x32xf32>
    %cst = arith.constant dense<0.000000e+00> : vector<16xf32>
    %8 = vector.multi_reduction <add>, %1, %cst [1] : vector<16x32xf32> to vector<16xf32>
    %9 = vector.shape_cast %8 : vector<16xf32> to vector<16x1xf32>
    %cst_7 = arith.constant 3.200000e+01 : f32
    %10 = vector.broadcast %cst_7 : f32 to vector<16x1xf32>
    %11 = arith.divf %9, %10 : vector<16x1xf32>
    %12 = vector.broadcast %11 : vector<16x1xf32> to vector<16x32xf32>
    %13 = arith.subf %1, %12 : vector<16x32xf32>
    %14 = arith.mulf %13, %13 : vector<16x32xf32>
    %cst_8 = arith.constant dense<0.000000e+00> : vector<16xf32>
    %15 = vector.multi_reduction <add>, %14, %cst_8 [1] : vector<16x32xf32> to vector<16xf32>
    %16 = vector.shape_cast %15 : vector<16xf32> to vector<16x1xf32>
    %cst_9 = arith.constant 3.200000e+01 : f32
    %17 = vector.broadcast %cst_9 : f32 to vector<16x1xf32>
    %18 = arith.divf %16, %17 : vector<16x1xf32>
    %19 = vector.broadcast %11 : vector<16x1xf32> to vector<16x32xf32>
    %20 = arith.subf %1, %19 : vector<16x32xf32>
    %cst_10 = arith.constant 9.99999974E-6 : f32
    %21 = vector.broadcast %cst_10 : f32 to vector<16x1xf32>
    %22 = arith.addf %18, %21 : vector<16x1xf32>
    %23 = math.rsqrt %22 : vector<16x1xf32>
    %24 = vector.broadcast %23 : vector<16x1xf32> to vector<16x32xf32>
    %25 = arith.mulf %20, %24 : vector<16x32xf32>
    %26 = vector.broadcast %4 : vector<1x32xf32> to vector<16x32xf32>
    %27 = arith.mulf %25, %26 : vector<16x32xf32>
    %28 = vector.broadcast %5 : vector<1x32xf32> to vector<16x32xf32>
    %29 = arith.addf %27, %28 : vector<16x32xf32>
    %c0_11 = arith.constant 0 : index
    %c0_12 = arith.constant 0 : index
    %30 = vector.load %arg4[%c0_11, %c0_12] : memref<32x96xf32, #tpu.memory_space<vmem>>, vector<32x96xf32>
    %cst_13 = arith.constant dense<0.000000e+00> : vector<16x96xf32>
    %31 = tpu.matmul %29, %30, %cst_13 {dimension_numbers = #tpu.dot_dimension_numbers<[1], [0], [0], [1], [0, 0, 1, 1], [], []>} : vector<16x32xf32>, vector<32x96xf32>, vector<16x96xf32> -> vector<16x96xf32>
    %c0_14 = arith.constant 0 : index
    %c0_15 = arith.constant 0 : index
    %32 = vector.load %arg5[%c0_14, %c0_15] : memref<1x96xf32, #tpu.memory_space<vmem>>, vector<1x96xf32>
    %33 = vector.broadcast %32 : vector<1x96xf32> to vector<16x96xf32>
    %34 = arith.addf %31, %33 : vector<16x96xf32>
    %cst_16 = arith.constant 8.000000e+00 : f32
    %35 = math.sqrt %cst_16 : f32
    %cst_17 = arith.constant 1.000000e+00 : f32
    %36 = arith.divf %cst_17, %35 : f32
    %37 = vector.extract_strided_slice %34 {offsets = [0, 0], sizes = [16, 32], strides = [1, 1]} : vector<16x96xf32> to vector<16x32xf32>
    %38 = vector.broadcast %36 : f32 to vector<16x32xf32>
    %39 = arith.mulf %37, %38 : vector<16x32xf32>
    %40 = vector.extract_strided_slice %34 {offsets = [0, 32], sizes = [16, 32], strides = [1, 1]} : vector<16x96xf32> to vector<16x32xf32>
    %41 = vector.extract_strided_slice %34 {offsets = [0, 64], sizes = [16, 32], strides = [1, 1]} : vector<16x96xf32> to vector<16x32xf32>
    %42 = vector.shape_cast %39 : vector<16x32xf32> to vector<2x8x32xf32>
    %43 = vector.shape_cast %40 : vector<16x32xf32> to vector<2x8x32xf32>
    %44 = vector.shape_cast %41 : vector<16x32xf32> to vector<2x8x32xf32>
    %cst_18 = arith.constant 1.000000e+00 : f32
    %45 = vector.broadcast %cst_18 : f32 to vector<2x1x8xf32>
    %46 = arith.subf %2, %45 : vector<2x1x8xf32>
    %cst_19 = arith.constant 1.000000e+09 : f32
    %47 = vector.broadcast %cst_19 : f32 to vector<2x1x8xf32>
    %48 = arith.mulf %46, %47 : vector<2x1x8xf32>
    %49 = vector.extract_strided_slice %42 {offsets = [0, 0, 0], sizes = [2, 8, 8], strides = [1, 1, 1]} : vector<2x8x32xf32> to vector<2x8x8xf32>
    %50 = vector.extract_strided_slice %43 {offsets = [0, 0, 0], sizes = [2, 8, 8], strides = [1, 1, 1]} : vector<2x8x32xf32> to vector<2x8x8xf32>
    %51 = vector.extract_strided_slice %44 {offsets = [0, 0, 0], sizes = [2, 8, 8], strides = [1, 1, 1]} : vector<2x8x32xf32> to vector<2x8x8xf32>
    "tpu.trace_start"() <{level = 10 : i32, message = "bqd,bkd->bqk"}> : () -> ()
    %cst_20 = arith.constant dense<0.000000e+00> : vector<2x8x8xf32>
    %52 = tpu.matmul %49, %50, %cst_20 {dimension_numbers = #tpu.dot_dimension_numbers<[2], [2], [1], [1], [0, 0, 0, 1, 1, 1], [0], [0]>} : vector<2x8x8xf32>, vector<2x8x8xf32>, vector<2x8x8xf32> -> vector<2x8x8xf32>
    "tpu.trace_stop"() : () -> ()
    %53 = vector.broadcast %48 : vector<2x1x8xf32> to vector<2x8x8xf32>
    %54 = arith.addf %52, %53 : vector<2x8x8xf32>
    %cst_21 = arith.constant dense<0xFF800000> : vector<2x8xf32>
    %55 = vector.multi_reduction <maximumf>, %54, %cst_21 [2] : vector<2x8x8xf32> to vector<2x8xf32>
    %56 = vector.shape_cast %55 : vector<2x8xf32> to vector<2x8x1xf32>
    %57 = vector.broadcast %56 : vector<2x8x1xf32> to vector<2x8x8xf32>
    %58 = arith.subf %54, %57 : vector<2x8x8xf32>
    %59 = math.exp %58 : vector<2x8x8xf32>
    %cst_22 = arith.constant dense<0.000000e+00> : vector<2x8xf32>
    %60 = vector.multi_reduction <add>, %59, %cst_22 [2] : vector<2x8x8xf32> to vector<2x8xf32>
    %61 = vector.shape_cast %60 : vector<2x8xf32> to vector<2x8x1xf32>
    %62 = tpu.reciprocal %61 {approx = true} : vector<2x8x1xf32> -> vector<2x8x1xf32>
    %63 = vector.broadcast %62 : vector<2x8x1xf32> to vector<2x8x8xf32>
    %64 = arith.mulf %59, %63 : vector<2x8x8xf32>
    "tpu.trace_start"() <{level = 10 : i32, message = "bqk,bkd->bqd"}> : () -> ()
    %cst_23 = arith.constant dense<0.000000e+00> : vector<2x8x8xf32>
    %65 = tpu.matmul %64, %51, %cst_23 {dimension_numbers = #tpu.dot_dimension_numbers<[2], [1], [1], [2], [0, 0, 0, 1, 1, 2], [0], [0]>} : vector<2x8x8xf32>, vector<2x8x8xf32>, vector<2x8x8xf32> -> vector<2x8x8xf32>
    "tpu.trace_stop"() : () -> ()
    %66 = vector.extract_strided_slice %42 {offsets = [0, 0, 8], sizes = [2, 8, 8], strides = [1, 1, 1]} : vector<2x8x32xf32> to vector<2x8x8xf32>
    %67 = vector.extract_strided_slice %43 {offsets = [0, 0, 8], sizes = [2, 8, 8], strides = [1, 1, 1]} : vector<2x8x32xf32> to vector<2x8x8xf32>
    %68 = vector.extract_strided_slice %44 {offsets = [0, 0, 8], sizes = [2, 8, 8], strides = [1, 1, 1]} : vector<2x8x32xf32> to vector<2x8x8xf32>
    "tpu.trace_start"() <{level = 10 : i32, message = "bqd,bkd->bqk"}> : () -> ()
    %cst_24 = arith.constant dense<0.000000e+00> : vector<2x8x8xf32>
    %69 = tpu.matmul %66, %67, %cst_24 {dimension_numbers = #tpu.dot_dimension_numbers<[2], [2], [1], [1], [0, 0, 0, 1, 1, 1], [0], [0]>} : vector<2x8x8xf32>, vector<2x8x8xf32>, vector<2x8x8xf32> -> vector<2x8x8xf32>
    "tpu.trace_stop"() : () -> ()
    %70 = vector.broadcast %48 : vector<2x1x8xf32> to vector<2x8x8xf32>
    %71 = arith.addf %69, %70 : vector<2x8x8xf32>
    %cst_25 = arith.constant dense<0xFF800000> : vector<2x8xf32>
    %72 = vector.multi_reduction <maximumf>, %71, %cst_25 [2] : vector<2x8x8xf32> to vector<2x8xf32>
    %73 = vector.shape_cast %72 : vector<2x8xf32> to vector<2x8x1xf32>
    %74 = vector.broadcast %73 : vector<2x8x1xf32> to vector<2x8x8xf32>
    %75 = arith.subf %71, %74 : vector<2x8x8xf32>
    %76 = math.exp %75 : vector<2x8x8xf32>
    %cst_26 = arith.constant dense<0.000000e+00> : vector<2x8xf32>
    %77 = vector.multi_reduction <add>, %76, %cst_26 [2] : vector<2x8x8xf32> to vector<2x8xf32>
    %78 = vector.shape_cast %77 : vector<2x8xf32> to vector<2x8x1xf32>
    %79 = tpu.reciprocal %78 {approx = true} : vector<2x8x1xf32> -> vector<2x8x1xf32>
    %80 = vector.broadcast %79 : vector<2x8x1xf32> to vector<2x8x8xf32>
    %81 = arith.mulf %76, %80 : vector<2x8x8xf32>
    "tpu.trace_start"() <{level = 10 : i32, message = "bqk,bkd->bqd"}> : () -> ()
    %cst_27 = arith.constant dense<0.000000e+00> : vector<2x8x8xf32>
    %82 = tpu.matmul %81, %68, %cst_27 {dimension_numbers = #tpu.dot_dimension_numbers<[2], [1], [1], [2], [0, 0, 0, 1, 1, 2], [0], [0]>} : vector<2x8x8xf32>, vector<2x8x8xf32>, vector<2x8x8xf32> -> vector<2x8x8xf32>
    "tpu.trace_stop"() : () -> ()
    %83 = vector.extract_strided_slice %42 {offsets = [0, 0, 16], sizes = [2, 8, 8], strides = [1, 1, 1]} : vector<2x8x32xf32> to vector<2x8x8xf32>
    %84 = vector.extract_strided_slice %43 {offsets = [0, 0, 16], sizes = [2, 8, 8], strides = [1, 1, 1]} : vector<2x8x32xf32> to vector<2x8x8xf32>
    %85 = vector.extract_strided_slice %44 {offsets = [0, 0, 16], sizes = [2, 8, 8], strides = [1, 1, 1]} : vector<2x8x32xf32> to vector<2x8x8xf32>
    "tpu.trace_start"() <{level = 10 : i32, message = "bqd,bkd->bqk"}> : () -> ()
    %cst_28 = arith.constant dense<0.000000e+00> : vector<2x8x8xf32>
    %86 = tpu.matmul %83, %84, %cst_28 {dimension_numbers = #tpu.dot_dimension_numbers<[2], [2], [1], [1], [0, 0, 0, 1, 1, 1], [0], [0]>} : vector<2x8x8xf32>, vector<2x8x8xf32>, vector<2x8x8xf32> -> vector<2x8x8xf32>
    "tpu.trace_stop"() : () -> ()
    %87 = vector.broadcast %48 : vector<2x1x8xf32> to vector<2x8x8xf32>
    %88 = arith.addf %86, %87 : vector<2x8x8xf32>
    %cst_29 = arith.constant dense<0xFF800000> : vector<2x8xf32>
    %89 = vector.multi_reduction <maximumf>, %88, %cst_29 [2] : vector<2x8x8xf32> to vector<2x8xf32>
    %90 = vector.shape_cast %89 : vector<2x8xf32> to vector<2x8x1xf32>
    %91 = vector.broadcast %90 : vector<2x8x1xf32> to vector<2x8x8xf32>
    %92 = arith.subf %88, %91 : vector<2x8x8xf32>
    %93 = math.exp %92 : vector<2x8x8xf32>
    %cst_30 = arith.constant dense<0.000000e+00> : vector<2x8xf32>
    %94 = vector.multi_reduction <add>, %93, %cst_30 [2] : vector<2x8x8xf32> to vector<2x8xf32>
    %95 = vector.shape_cast %94 : vector<2x8xf32> to vector<2x8x1xf32>
    %96 = tpu.reciprocal %95 {approx = true} : vector<2x8x1xf32> -> vector<2x8x1xf32>
    %97 = vector.broadcast %96 : vector<2x8x1xf32> to vector<2x8x8xf32>
    %98 = arith.mulf %93, %97 : vector<2x8x8xf32>
    "tpu.trace_start"() <{level = 10 : i32, message = "bqk,bkd->bqd"}> : () -> ()
    %cst_31 = arith.constant dense<0.000000e+00> : vector<2x8x8xf32>
    %99 = tpu.matmul %98, %85, %cst_31 {dimension_numbers = #tpu.dot_dimension_numbers<[2], [1], [1], [2], [0, 0, 0, 1, 1, 2], [0], [0]>} : vector<2x8x8xf32>, vector<2x8x8xf32>, vector<2x8x8xf32> -> vector<2x8x8xf32>
    "tpu.trace_stop"() : () -> ()
    %100 = vector.extract_strided_slice %42 {offsets = [0, 0, 24], sizes = [2, 8, 8], strides = [1, 1, 1]} : vector<2x8x32xf32> to vector<2x8x8xf32>
    %101 = vector.extract_strided_slice %43 {offsets = [0, 0, 24], sizes = [2, 8, 8], strides = [1, 1, 1]} : vector<2x8x32xf32> to vector<2x8x8xf32>
    %102 = vector.extract_strided_slice %44 {offsets = [0, 0, 24], sizes = [2, 8, 8], strides = [1, 1, 1]} : vector<2x8x32xf32> to vector<2x8x8xf32>
    "tpu.trace_start"() <{level = 10 : i32, message = "bqd,bkd->bqk"}> : () -> ()
    %cst_32 = arith.constant dense<0.000000e+00> : vector<2x8x8xf32>
    %103 = tpu.matmul %100, %101, %cst_32 {dimension_numbers = #tpu.dot_dimension_numbers<[2], [2], [1], [1], [0, 0, 0, 1, 1, 1], [0], [0]>} : vector<2x8x8xf32>, vector<2x8x8xf32>, vector<2x8x8xf32> -> vector<2x8x8xf32>
    "tpu.trace_stop"() : () -> ()
    %104 = vector.broadcast %48 : vector<2x1x8xf32> to vector<2x8x8xf32>
    %105 = arith.addf %103, %104 : vector<2x8x8xf32>
    %cst_33 = arith.constant dense<0xFF800000> : vector<2x8xf32>
    %106 = vector.multi_reduction <maximumf>, %105, %cst_33 [2] : vector<2x8x8xf32> to vector<2x8xf32>
    %107 = vector.shape_cast %106 : vector<2x8xf32> to vector<2x8x1xf32>
    %108 = vector.broadcast %107 : vector<2x8x1xf32> to vector<2x8x8xf32>
    %109 = arith.subf %105, %108 : vector<2x8x8xf32>
    %110 = math.exp %109 : vector<2x8x8xf32>
    %cst_34 = arith.constant dense<0.000000e+00> : vector<2x8xf32>
    %111 = vector.multi_reduction <add>, %110, %cst_34 [2] : vector<2x8x8xf32> to vector<2x8xf32>
    %112 = vector.shape_cast %111 : vector<2x8xf32> to vector<2x8x1xf32>
    %113 = tpu.reciprocal %112 {approx = true} : vector<2x8x1xf32> -> vector<2x8x1xf32>
    %114 = vector.broadcast %113 : vector<2x8x1xf32> to vector<2x8x8xf32>
    %115 = arith.mulf %110, %114 : vector<2x8x8xf32>
    "tpu.trace_start"() <{level = 10 : i32, message = "bqk,bkd->bqd"}> : () -> ()
    %cst_35 = arith.constant dense<0.000000e+00> : vector<2x8x8xf32>
    %116 = tpu.matmul %115, %102, %cst_35 {dimension_numbers = #tpu.dot_dimension_numbers<[2], [1], [1], [2], [0, 0, 0, 1, 1, 2], [0], [0]>} : vector<2x8x8xf32>, vector<2x8x8xf32>, vector<2x8x8xf32> -> vector<2x8x8xf32>
    "tpu.trace_stop"() : () -> ()
    %117 = tpu.concatenate %65, %82, %99, %116 in 2 : vector<2x8x8xf32>, vector<2x8x8xf32>, vector<2x8x8xf32>, vector<2x8x8xf32> -> vector<2x8x32xf32>
    %118 = vector.shape_cast %117 : vector<2x8x32xf32> to vector<16x32xf32>
    %c0_36 = arith.constant 0 : index
    %c0_37 = arith.constant 0 : index
    %119 = vector.load %arg6[%c0_36, %c0_37] : memref<32x32xf32, #tpu.memory_space<vmem>>, vector<32x32xf32>
    %cst_38 = arith.constant dense<0.000000e+00> : vector<16x32xf32>
    %120 = tpu.matmul %118, %119, %cst_38 {dimension_numbers = #tpu.dot_dimension_numbers<[1], [0], [0], [1], [0, 0, 1, 1], [], []>} : vector<16x32xf32>, vector<32x32xf32>, vector<16x32xf32> -> vector<16x32xf32>
    %c0_39 = arith.constant 0 : index
    %c0_40 = arith.constant 0 : index
    %121 = vector.load %arg7[%c0_39, %c0_40] : memref<1x32xf32, #tpu.memory_space<vmem>>, vector<1x32xf32>
    %122 = vector.broadcast %121 : vector<1x32xf32> to vector<16x32xf32>
    %123 = arith.addf %120, %122 : vector<16x32xf32>
    %124 = arith.addf %1, %123 : vector<16x32xf32>
    %cst_41 = arith.constant dense<0.000000e+00> : vector<16xf32>
    %125 = vector.multi_reduction <add>, %124, %cst_41 [1] : vector<16x32xf32> to vector<16xf32>
    %126 = vector.shape_cast %125 : vector<16xf32> to vector<16x1xf32>
    %cst_42 = arith.constant 3.200000e+01 : f32
    %127 = vector.broadcast %cst_42 : f32 to vector<16x1xf32>
    %128 = arith.divf %126, %127 : vector<16x1xf32>
    %129 = vector.broadcast %128 : vector<16x1xf32> to vector<16x32xf32>
    %130 = arith.subf %124, %129 : vector<16x32xf32>
    %131 = arith.mulf %130, %130 : vector<16x32xf32>
    %cst_43 = arith.constant dense<0.000000e+00> : vector<16xf32>
    %132 = vector.multi_reduction <add>, %131, %cst_43 [1] : vector<16x32xf32> to vector<16xf32>
    %133 = vector.shape_cast %132 : vector<16xf32> to vector<16x1xf32>
    %cst_44 = arith.constant 3.200000e+01 : f32
    %134 = vector.broadcast %cst_44 : f32 to vector<16x1xf32>
    %135 = arith.divf %133, %134 : vector<16x1xf32>
    %136 = vector.broadcast %128 : vector<16x1xf32> to vector<16x32xf32>
    %137 = arith.subf %124, %136 : vector<16x32xf32>
    %cst_45 = arith.constant 9.99999974E-6 : f32
    %138 = vector.broadcast %cst_45 : f32 to vector<16x1xf32>
    %139 = arith.addf %135, %138 : vector<16x1xf32>
    %140 = math.rsqrt %139 : vector<16x1xf32>
    %141 = vector.broadcast %140 : vector<16x1xf32> to vector<16x32xf32>
    %142 = arith.mulf %137, %141 : vector<16x32xf32>
    %143 = vector.broadcast %6 : vector<1x32xf32> to vector<16x32xf32>
    %144 = arith.mulf %142, %143 : vector<16x32xf32>
    %145 = vector.broadcast %7 : vector<1x32xf32> to vector<16x32xf32>
    %146 = arith.addf %144, %145 : vector<16x32xf32>
    %c0_46 = arith.constant 0 : index
    %c0_47 = arith.constant 0 : index
    %147 = vector.load %arg8[%c0_46, %c0_47] : memref<32x64xf32, #tpu.memory_space<vmem>>, vector<32x64xf32>
    %cst_48 = arith.constant dense<0.000000e+00> : vector<16x64xf32>
    %148 = tpu.matmul %146, %147, %cst_48 {dimension_numbers = #tpu.dot_dimension_numbers<[1], [0], [0], [1], [0, 0, 1, 1], [], []>} : vector<16x32xf32>, vector<32x64xf32>, vector<16x64xf32> -> vector<16x64xf32>
    %c0_49 = arith.constant 0 : index
    %c0_50 = arith.constant 0 : index
    %149 = vector.load %arg9[%c0_49, %c0_50] : memref<1x64xf32, #tpu.memory_space<vmem>>, vector<1x64xf32>
    %150 = vector.broadcast %149 : vector<1x64xf32> to vector<16x64xf32>
    %151 = arith.addf %148, %150 : vector<16x64xf32>
    %cst_51 = arith.constant 0.000000e+00 : f32
    %152 = vector.broadcast %cst_51 : f32 to vector<16x64xf32>
    %153 = arith.maximumf %151, %152 : vector<16x64xf32>
    %c0_52 = arith.constant 0 : index
    %c0_53 = arith.constant 0 : index
    %154 = vector.load %arg10[%c0_52, %c0_53] : memref<64x32xf32, #tpu.memory_space<vmem>>, vector<64x32xf32>
    %cst_54 = arith.constant dense<0.000000e+00> : vector<16x32xf32>
    %155 = tpu.matmul %153, %154, %cst_54 {dimension_numbers = #tpu.dot_dimension_numbers<[1], [0], [0], [1], [0, 0, 1, 1], [], []>} : vector<16x64xf32>, vector<64x32xf32>, vector<16x32xf32> -> vector<16x32xf32>
    %c0_55 = arith.constant 0 : index
    %c0_56 = arith.constant 0 : index
    %156 = vector.load %arg11[%c0_55, %c0_56] : memref<1x32xf32, #tpu.memory_space<vmem>>, vector<1x32xf32>
    %157 = vector.broadcast %156 : vector<1x32xf32> to vector<16x32xf32>
    %158 = arith.addf %155, %157 : vector<16x32xf32>
    %159 = arith.addf %124, %158 : vector<16x32xf32>
    %c0_57 = arith.constant 0 : index
    %c0_58 = arith.constant 0 : index
    %160 = vector.load %arg12[%c0_57, %c0_58] : memref<16x32xf32, #tpu.memory_space<vmem>>, vector<16x32xf32>
    tpu.vector_store %arg12[%c0_57, %c0_58], %159 {strides = array<i32>} : memref<16x32xf32, #tpu.memory_space<vmem>>, vector<16x32xf32>,
    %161 = vector.shape_cast %64 : vector<2x8x8xf32> to vector<16x8xf32>
    %162 = vector.shape_cast %81 : vector<2x8x8xf32> to vector<16x8xf32>
    %163 = vector.shape_cast %98 : vector<2x8x8xf32> to vector<16x8xf32>
    %164 = vector.shape_cast %115 : vector<2x8x8xf32> to vector<16x8xf32>
    %165 = tpu.concatenate %161, %162, %163, %164 in 1 : vector<16x8xf32>, vector<16x8xf32>, vector<16x8xf32>, vector<16x8xf32> -> vector<16x32xf32>
    %c0_59 = arith.constant 0 : index
    %c0_60 = arith.constant 0 : index
    %166 = vector.load %arg13[%c0_59, %c0_60] : memref<16x32xf32, #tpu.memory_space<vmem>>, vector<16x32xf32>
    tpu.vector_store %arg13[%c0_59, %c0_60], %165 {strides = array<i32>} : memref<16x32xf32, #tpu.memory_space<vmem>>, vector<16x32xf32>,
    return
  }
  func.func @transform_0(%arg0: i32) -> (i32, i32, i32) {
    %c0_i32 = arith.constant 0 : i32
    %c0_i32_0 = arith.constant 0 : i32
    %c0_i32_1 = arith.constant 0 : i32
    return %arg0, %c0_i32, %c0_i32_0 : i32, i32, i32
  }
  func.func @transform_1(%arg0: i32) -> (i32, i32, i32) {
    %c0_i32 = arith.constant 0 : i32
    %c0_i32_0 = arith.constant 0 : i32
    %c0_i32_1 = arith.constant 0 : i32
    return %arg0, %c0_i32, %c0_i32_0 : i32, i32, i32
  }
  func.func @transform_2(%arg0: i32) -> (i32, i32) {
    %c0_i32 = arith.constant 0 : i32
    %c0_i32_0 = arith.constant 0 : i32
    %c0_i32_1 = arith.constant 0 : i32
    return %c0_i32, %c0_i32_0 : i32, i32
  }
  func.func @transform_3(%arg0: i32) -> (i32, i32) {
    %c0_i32 = arith.constant 0 : i32
    %c0_i32_0 = arith.constant 0 : i32
    %c0_i32_1 = arith.constant 0 : i32
    return %c0_i32, %c0_i32_0 : i32, i32
  }
  func.func @transform_4(%arg0: i32) -> (i32, i32) {
    %c0_i32 = arith.constant 0 : i32
    %c0_i32_0 = arith.constant 0 : i32
    %c0_i32_1 = arith.constant 0 : i32
    return %c0_i32, %c0_i32_0 : i32, i32
  }
  func.func @transform_5(%arg0: i32) -> (i32, i32) {
    %c0_i32 = arith.constant 0 : i32
    %c0_i32_0 = arith.constant 0 : i32
    %c0_i32_1 = arith.constant 0 : i32
    return %c0_i32, %c0_i32_0 : i32, i32
  }
  func.func @transform_6(%arg0: i32) -> (i32, i32) {
    %c0_i32 = arith.constant 0 : i32
    %c0_i32_0 = arith.constant 0 : i32
    %c0_i32_1 = arith.constant 0 : i32
    return %c0_i32, %c0_i32_0 : i32, i32
  }
  func.func @transform_7(%arg0: i32) -> (i32, i32) {
    %c0_i32 = arith.constant 0 : i32
    %c0_i32_0 = arith.constant 0 : i32
    %c0_i32_1 = arith.constant 0 : i32
    return %c0_i32, %c0_i32_0 : i32, i32
  }
  func.func @transform_8(%arg0: i32) -> (i32, i32) {
    %c0_i32 = arith.constant 0 : i32
    %c0_i32_0 = arith.constant 0 : i32
    %c0_i32_1 = arith.constant 0 : i32
    return %c0_i32, %c0_i32_0 : i32, i32
  }
  func.func @transform_9(%arg0: i32) -> (i32, i32) {
    %c0_i32 = arith.constant 0 : i32
    %c0_i32_0 = arith.constant 0 : i32
    %c0_i32_1 = arith.constant 0 : i32
    return %c0_i32, %c0_i32_0 : i32, i32
  }
  func.func @transform_10(%arg0: i32) -> (i32, i32) {
    %c0_i32 = arith.constant 0 : i32
    %c0_i32_0 = arith.constant 0 : i32
    %c0_i32_1 = arith.constant 0 : i32
    return %c0_i32, %c0_i32_0 : i32, i32
  }
  func.func @transform_11(%arg0: i32) -> (i32, i32) {
    %c0_i32 = arith.constant 0 : i32
    %c0_i32_0 = arith.constant 0 : i32
    return %arg0, %c0_i32 : i32, i32
  }
  func.func @transform_12(%arg0: i32) -> (i32, i32) {
    %c0_i32 = arith.constant 0 : i32
    %c0_i32_0 = arith.constant 0 : i32
    return %arg0, %c0_i32 : i32, i32
  }
}

</mosaic_0001>

<llo_original>
// kernel: tpu_custom_call.1
$region0: #{tpu_custom_call.1}
  #allocation0 [shape = 'u32[]', space=smem, size = 0x4, offset = 0x4, fixed_abs, tag = 'smem constant byte address 0x4 - core index']
  #allocation1 [shape = 'u32[144,128]{1,0:T(1,128)}', space=vmem, size = 0x12000, scoped, tag = 'internal scratch']
  %s0 = inlined_call_operand.hbm [shape: f32[2,8,32], index: 0, kind: input, shape index: {}]
  %s1 = inlined_call_operand.vmem [shape: f32[2,1,8], index: 1, kind: input, shape index: {}]
  %s2 = inlined_call_operand.hbm [shape: f32[4,32], index: 2, kind: input, shape index: {}]
  %s3 = inlined_call_operand.vmem [shape: f32[32,96], index: 3, kind: input, shape index: {}]
  %s4 = inlined_call_operand.hbm [shape: f32[1,96], index: 4, kind: input, shape index: {}]
  %s5 = inlined_call_operand.vmem [shape: f32[32,32], index: 5, kind: input, shape index: {}]
  %s6 = inlined_call_operand.hbm [shape: f32[1,32], index: 6, kind: input, shape index: {}]
  %s7 = inlined_call_operand.vmem [shape: f32[32,64], index: 7, kind: input, shape index: {}]
  %s8 = inlined_call_operand.hbm [shape: f32[1,64], index: 8, kind: input, shape index: {}]
  %s9 = inlined_call_operand.vmem [shape: f32[64,32], index: 9, kind: input, shape index: {}]
  %s10 = inlined_call_operand.vmem [shape: f32[1,32], index: 10, kind: input, shape index: {}]
  %s11 = inlined_call_operand.hbm [shape: f32[16,32], index: 11, kind: output, shape index: {0}]
  %s12 = inlined_call_operand.hbm [shape: f32[16,32], index: 12, kind: output, shape index: {1}]
  %13 = xla_tuple %s11, %s12
  %s14 = sld [smem:[#allocation0]]
  $region82: #{tpu_custom_call.1} parent=0
    _
  %s16 = ssub.s32 1, %s14
  %s17 = scalar_select 0, %s16, %s14
  $region1: #{tpu_custom_call.1} parent=0
    #allocation2 [shape = 'u8[8192]{0}', space=vmem, size = 0x2000, scoped, tag = 'input window, operand 0, single buffered']
    #allocation3 [shape = 's32[1]{0}', space=sflag, size = 0x4, scoped, tag = 'scoped memory for tpu_custom_call.1']
    #allocation4 [shape = 's32[1]{0}', space=sflag, size = 0x4, scoped, tag = 'scoped memory for tpu_custom_call.1']
    #allocation5 [shape = 'u8[2048]{0}', space=vmem, size = 0x800, scoped, tag = 'input window, operand 2, single buffered']
    #allocation6 [shape = 's32[1]{0}', space=sflag, size = 0x4, scoped, tag = 'scoped memory for tpu_custom_call.1']
    #allocation7 [shape = 'u8[512]{0}', space=vmem, size = 0x400, scoped, tag = 'input window, operand 4, single buffered']
    #allocation8 [shape = 'u8[512]{0}', space=vmem, size = 0x400, scoped, tag = 'input window, operand 6, single buffered']
    #allocation9 [shape = 's32[1]{0}', space=sflag, size = 0x4, scoped, tag = 'scoped memory for tpu_custom_call.1']
    #allocation10 [shape = 'u8[512]{0}', space=vmem, size = 0x400, scoped, tag = 'input window, operand 8, single buffered']
    #allocation11 [shape = 'u8[8192]{0}', space=vmem, size = 0x2000, scoped, tag = 'output window, operand 0, single buffered']
    #allocation12 [shape = 'u8[8192]{0}', space=vmem, size = 0x2000, scoped, tag = 'output window, operand 1, single buffered']
    #allocation13 [shape = 's32[1]{0}', space=sflag, size = 0x4, scoped, tag = 'scoped memory for tpu_custom_call.1']
    %18 = vsyncpa [#allocation3], 0
    %19 = vsyncpa [#allocation6], 0
    %20 = vsyncpa [#allocation9], 0
    %21 = vsyncpa [#allocation4], 0
    %22 = vsyncpa [#allocation13], 0
    // Predicated region
    $region2: #{tpu_custom_call.1} parent=1 // pred_check
      _
    $region3: #{tpu_custom_call.1} parent=1 // pred_check_branch
      %24 = sbr.rel (0) target = $region5
    $region4: #{tpu_custom_call.1} parent=1 // pred_region
      %s26 = ssub.s32 256, 256
      %27 = vsyncadd [#allocation3], %s26
      %s28 = sshll.u32 [#allocation2], 4
      %s29 = int_to_ptr.vmem [resolvable:$true] %s28
      %34 = dma.hbm_to_vmem [thread:$0]  %s0, 256, %s29, [#allocation3], 128, 128, 8
    $region5: #{tpu_custom_call.1} parent=1 // pred_fallthru
      _
    // Predicated region
    $region6: #{tpu_custom_call.1} parent=1 // pred_check
      _
    $region7: #{tpu_custom_call.1} parent=1 // pred_check_branch
      %36 = sbr.rel (0) target = $region9
    $region8: #{tpu_custom_call.1} parent=1 // pred_region
      _
    $region9: #{tpu_custom_call.1} parent=1 // pred_fallthru
      _
    // Predicated region
    $region10: #{tpu_custom_call.1} parent=1 // pred_check
      _
    $region11: #{tpu_custom_call.1} parent=1 // pred_check_branch
      %38 = sbr.rel (0) target = $region13
    $region12: #{tpu_custom_call.1} parent=1 // pred_region
      %s40 = ssub.s32 64, 64
      %41 = vsyncadd [#allocation6], %s40
      %s43 = sshll.u32 [#allocation5], 4
      %s44 = int_to_ptr.vmem [resolvable:$true] %s43
      %46 = dma.hbm_to_vmem [thread:$0]  %s2, 64, %s44, [#allocation6]
    $region13: #{tpu_custom_call.1} parent=1 // pred_fallthru
      _
    // Predicated region
    $region14: #{tpu_custom_call.1} parent=1 // pred_check
      _
    $region15: #{tpu_custom_call.1} parent=1 // pred_check_branch
      %48 = sbr.rel (0) target = $region17
    $region16: #{tpu_custom_call.1} parent=1 // pred_region
      _
    $region17: #{tpu_custom_call.1} parent=1 // pred_fallthru
      _
    // Predicated region
    $region18: #{tpu_custom_call.1} parent=1 // pred_check
      _
    $region19: #{tpu_custom_call.1} parent=1 // pred_check_branch
      %50 = sbr.rel (0) target = $region21
    $region20: #{tpu_custom_call.1} parent=1 // pred_region
      %s52 = ssub.s32 16, 16
      %53 = vsyncadd [#allocation6], %s52
      %s55 = sshll.u32 [#allocation7], 4
      %s56 = int_to_ptr.vmem [resolvable:$true] %s55
      %58 = dma.hbm_to_vmem [thread:$0]  %s4, 16, %s56, [#allocation6]
    $region21: #{tpu_custom_call.1} parent=1 // pred_fallthru
      _
    // Predicated region
    $region22: #{tpu_custom_call.1} parent=1 // pred_check
      _
    $region23: #{tpu_custom_call.1} parent=1 // pred_check_branch
      %60 = sbr.rel (0) target = $region25
    $region24: #{tpu_custom_call.1} parent=1 // pred_region
      _
    $region25: #{tpu_custom_call.1} parent=1 // pred_fallthru
      _
    // Predicated region
    $region26: #{tpu_custom_call.1} parent=1 // pred_check
      _
    $region27: #{tpu_custom_call.1} parent=1 // pred_check_branch
      %62 = sbr.rel (0) target = $region29
    $region28: #{tpu_custom_call.1} parent=1 // pred_region
      %s64 = ssub.s32 16, 16
      %65 = vsyncadd [#allocation9], %s64
      %s67 = sshll.u32 [#allocation8], 4
      %s68 = int_to_ptr.vmem [resolvable:$true] %s67
      %70 = dma.hbm_to_vmem [thread:$0]  %s6, 16, %s68, [#allocation9]
    $region29: #{tpu_custom_call.1} parent=1 // pred_fallthru
      _
    // Predicated region
    $region30: #{tpu_custom_call.1} parent=1 // pred_check
      _
    $region31: #{tpu_custom_call.1} parent=1 // pred_check_branch
      %72 = sbr.rel (0) target = $region33
    $region32: #{tpu_custom_call.1} parent=1 // pred_region
      _
    $region33: #{tpu_custom_call.1} parent=1 // pred_fallthru
      _
    // Predicated region
    $region34: #{tpu_custom_call.1} parent=1 // pred_check
      _
    $region35: #{tpu_custom_call.1} parent=1 // pred_check_branch
      %74 = sbr.rel (0) target = $region37
    $region36: #{tpu_custom_call.1} parent=1 // pred_region
      %s76 = ssub.s32 16, 16
      %77 = vsyncadd [#allocation9], %s76
      %s79 = sshll.u32 [#allocation10], 4
      %s80 = int_to_ptr.vmem [resolvable:$true] %s79
      %82 = dma.hbm_to_vmem [thread:$0]  %s8, 16, %s80, [#allocation9]
    $region37: #{tpu_custom_call.1} parent=1 // pred_fallthru
      _
    // Predicated region
    $region38: #{tpu_custom_call.1} parent=1 // pred_check
      _
    $region39: #{tpu_custom_call.1} parent=1 // pred_check_branch
      %84 = sbr.rel (0) target = $region41
    $region40: #{tpu_custom_call.1} parent=1 // pred_region
      _
    $region41: #{tpu_custom_call.1} parent=1 // pred_fallthru
      _
    // Predicated region
    $region42: #{tpu_custom_call.1} parent=1 // pred_check
      _
    $region43: #{tpu_custom_call.1} parent=1 // pred_check_branch
      %86 = sbr.rel (0) target = $region45
    $region44: #{tpu_custom_call.1} parent=1 // pred_region
      _
    $region45: #{tpu_custom_call.1} parent=1 // pred_fallthru
      _
    // Predicated region
    $region46: #{tpu_custom_call.1} parent=1 // pred_check
      _
    $region47: #{tpu_custom_call.1} parent=1 // pred_check_branch
      %88 = sbr.rel (0) target = $region49
    $region48: #{tpu_custom_call.1} parent=1 // pred_region
      %89 = dma.done [#allocation3], 256
    $region49: #{tpu_custom_call.1} parent=1 // pred_fallthru
      _
    // Predicated region
    $region50: #{tpu_custom_call.1} parent=1 // pred_check
      _
    $region51: #{tpu_custom_call.1} parent=1 // pred_check_branch
      %91 = sbr.rel (0) target = $region53
    $region52: #{tpu_custom_call.1} parent=1 // pred_region
      %92 = dma.done [#allocation6], 64
    $region53: #{tpu_custom_call.1} parent=1 // pred_fallthru
      _
    // Predicated region
    $region54: #{tpu_custom_call.1} parent=1 // pred_check
      _
    $region55: #{tpu_custom_call.1} parent=1 // pred_check_branch
      %94 = sbr.rel (0) target = $region57
    $region56: #{tpu_custom_call.1} parent=1 // pred_region
      %95 = dma.done [#allocation6], 16
    $region57: #{tpu_custom_call.1} parent=1 // pred_fallthru
      _
    // Predicated region
    $region58: #{tpu_custom_call.1} parent=1 // pred_check
      _
    $region59: #{tpu_custom_call.1} parent=1 // pred_check_branch
      %97 = sbr.rel (0) target = $region61
    $region60: #{tpu_custom_call.1} parent=1 // pred_region
      %98 = dma.done [#allocation9], 16
    $region61: #{tpu_custom_call.1} parent=1 // pred_fallthru
      _
    // Predicated region
    $region62: #{tpu_custom_call.1} parent=1 // pred_check
      _
    $region63: #{tpu_custom_call.1} parent=1 // pred_check_branch
      %100 = sbr.rel (0) target = $region65
    $region64: #{tpu_custom_call.1} parent=1 // pred_region
      %101 = dma.done [#allocation9], 16
    $region65: #{tpu_custom_call.1} parent=1 // pred_fallthru
      _
    %v102 = vld [vmem:[#allocation2] sm:$0xff]
    %v103 = vld [vmem:[#allocation2 + $0x8] sm:$0xff]
    %v104 = vld [vmem:[%s1] sm:$0x1]
    %v105 = vld [vmem:[%s1 + $0x1] sm:$0x1]
    %v106 = vld [vmem:[#allocation5] sm:$0xf]
    %vm107 = vcmask 261120
    %v108 = vsel %vm107, %v102, 0.0
    %109 = vadd.xlane.f32.xlu0 %v108
    %v110 = vpop.xlane.xlu0 %109
    %v111 = vsel %vm107, %v103, 0.0
    %112 = vadd.xlane.f32.xlu0 %v111
    %v113 = vpop.xlane.xlu0 %112
    %v114 = vrcp.pop 32.0
    %v115 = vmul.f32 %v110, %v114
    %v116 = vmul.f32 %v113, %v114
    %v117 = vsub.f32 %v102, %v115
    %v118 = vsub.f32 %v103, %v116
    %v119 = vmul.f32 %v117, %v117
    %v120 = vmul.f32 %v118, %v118
    %v121 = vsel %vm107, %v119, 0.0
    %122 = vadd.xlane.f32.xlu0 %v121
    %v123 = vpop.xlane.xlu0 %122
    %v124 = vsel %vm107, %v120, 0.0
    %125 = vadd.xlane.f32.xlu0 %v124
    %v126 = vpop.xlane.xlu0 %125
    %v127 = vmul.f32 %v123, %v114
    %v128 = vmul.f32 %v126, %v114
    %v129 = vadd.f32 %v127, 1e-05
    %v130 = vadd.f32 %v128, 1e-05
    %v131 = vrsqrt.pop %v129
    %v132 = vrsqrt.pop %v130
    %v133 = vmul.f32 %v117, %v131
    %v134 = vmul.f32 %v118, %v132
    %v135 = vlaneseq
    %v136 = vshrl.u32 %v135, 7
    %v137 = vsub.s32 0, %v136
    %v138 = vrot.slane %v106, %v137
    %v139 = vmul.f32 %v133, %v138
    %v140 = vmul.f32 %v134, %v138
    %v141 = vlaneseq
    %v142 = vshrl.u32 %v141, 7
    %v143 = vsub.s32 1, %v142
    %v144 = vrot.slane %v106, %v143
    %v145 = vadd.f32 %v139, %v144
    %v146 = vadd.f32 %v140, %v144
    %v147 = vld [vmem:[%s3] sm:$0xff]
    %v148 = vld [vmem:[%s3 + $0x8] sm:$0xff]
    %v149 = vld [vmem:[%s3 + $0x10] sm:$0xff]
    %v150 = vld [vmem:[%s3 + $0x18] sm:$0xff]
    %v151 = vld [vmem:[#allocation7] sm:$0x1]
    %v153 = vlaneseq
    %v154 = vshrl.u32 %v153, 7
    %v155 = vsub.s32 0, %v154
    %v156 = vrot.slane %v151, %v155
    %v159 = vsel %vm107, %v145, 0
    %v162 = vsel %vm107, %v146, 0
    %164 = vmatprep.subr.mxu0 0.0
    %165 = vmatpush1.msra.mxu0 %v147
    %166 = vmatprep.subr.mxu0 0.0
    %167 = vmatpush1.msra.mxu0 %v148
    %168 = vmatprep.subr.mxu0 0.0
    %169 = vmatpush1.msra.mxu0 %v149
    %170 = vmatprep.subr.mxu0 0.0
    %171 = vmatpush1.msra.mxu0 %v150
    %172 = vmatprep.subr.mxu0 0.0
    %173 = vmatpush1.msra.mxu0 0.0
    %174 = vmatprep.subr.mxu0 0.0
    %175 = vmatpush1.msra.mxu0 0.0
    %176 = vmatprep.subr.mxu0 0.0
    %177 = vmatpush1.msra.mxu0 0.0
    %178 = vmatprep.subr.mxu0 0.0
    %179 = vmatpush1.msra.mxu0 0.0
    %180 = vmatprep.subr.mxu0 0.0
    %181 = vmatpush1.msra.mxu0 0.0
    %182 = vmatprep.subr.mxu0 0.0
    %183 = vmatpush1.msra.mxu0 0.0
    %184 = vmatprep.subr.mxu0 0.0
    %185 = vmatpush1.msra.mxu0 0.0
    %186 = vmatprep.subr.mxu0 0.0
    %187 = vmatpush1.msra.mxu0 0.0
    %188 = vmatprep.subr.mxu0 0.0
    %189 = vmatpush1.msra.mxu0 0.0
    %190 = vmatprep.subr.mxu0 0.0
    %191 = vmatpush1.msra.mxu0 0.0
    %192 = vmatprep.subr.mxu0 0.0
    %193 = vmatpush1.msra.mxu0 0.0
    %194 = vmatprep.subr.mxu0 0.0
    %195 = vmatpush1.msra.mxu0 0.0
    %196 = vmatprep.subr.mxu0 0.0
    %197 = vmatpush1.msra.mxu0 0.0
    %198 = vmatprep.subr.mxu0 0.0
    %199 = vmatpush1.msra.mxu0 0.0
    %200 = vmatprep.subr.mxu0 0.0
    %201 = vmatpush1.msra.mxu0 0.0
    %202 = vmatprep.subr.mxu0 0.0
    %203 = vmatpush1.msra.mxu0 0.0
    %204 = vmatprep.subr.mxu0 0.0
    %205 = vmatpush1.msra.mxu0 0.0
    %206 = vmatprep.subr.mxu0 0.0
    %207 = vmatpush1.msra.mxu0 0.0
    %208 = vmatprep.subr.mxu0 0.0
    %209 = vmatpush1.msra.mxu0 0.0
    %210 = vmatprep.subr.mxu0 0.0
    %211 = vmatpush1.msra.mxu0 0.0
    %212 = vmatprep.subr.mxu0 0.0
    %213 = vmatpush1.msra.mxu0 0.0
    %214 = vmatprep.subr.mxu0 0.0
    %215 = vmatpush1.msra.mxu0 0.0
    %216 = vmatprep.subr.mxu0 0.0
    %217 = vmatpush1.msra.mxu0 0.0
    %218 = vmatprep.subr.mxu0 0.0
    %219 = vmatpush1.msra.mxu0 0.0
    %220 = vmatprep.subr.mxu0 0.0
    %221 = vmatpush1.msra.mxu0 0.0
    %222 = vmatprep.subr.mxu0 0.0
    %223 = vmatpush1.msra.mxu0 0.0
    %224 = vmatprep.subr.mxu0 0.0
    %225 = vmatpush1.msra.mxu0 0.0
    %226 = vmatprep.subr.mxu0 0.0
    %227 = vmatpush1.msra.mxu0 0.0
    %228 = vmatprep.mubr.f32.mxu0 0.0
    %229 = vmatmul.mubr.f32.gmra.mrb[0].mxu0 %v159
    %v230 = vpop.f32.mrb[0].mxu0
    %v231 = vadd.f32 %v156, %v230
    %v232 = vpop.f32.mrb[0].mxu0
    %233 = vmatprep.mubr.f32.mxu0 0.0
    %234 = vmatmul.mubr.f32.gmra.mrb[0].mxu0 %v162
    %v235 = vpop.f32.mrb[0].mxu0
    %v236 = vadd.f32 %v156, %v235
    %v237 = vpop.f32.mrb[0].mxu0
    %238 = vdwg.mxu0
    %v239 = vmul.f32 %v231, 0.35355338
    %v240 = vmul.f32 %v236, 0.35355338
    %v241 = vsub.f32 %v104, 1.0
    %v242 = vsub.f32 %v105, 1.0
    %v243 = vmul.f32 %v241, 1e+09
    %v244 = vmul.f32 %v242, 1e+09
    %v247 = vlaneseq
    %v248 = vshrl.u32 %v247, 7
    %v249 = vsub.s32 0, %v248
    %v250 = vrot.slane %v243, %v249
    %v251 = vlaneseq
    %v252 = vshrl.u32 %v251, 7
    %v253 = vsub.s32 0, %v252
    %v254 = vrot.slane %v244, %v253
    %258 = vrot.lane.b32.xlu0 %v231, 96
    %v259 = vpop.permute.xlu0 %258
    %vm260 = vcmask 64512
    %v262 = vsel %vm260, %v239, 0
    %v264 = vsel %vm260, %v259, 0
    %266 = vmatprep.subr.mxu0 0.0
    %267 = vmatpush1.xpose.msra.mxu0 %v264
    %268 = vmatprep.subr.mxu0 0.0
    %269 = vmatpush1.xpose.msra.mxu0 0.0
    %270 = vmatprep.subr.mxu0 0.0
    %271 = vmatpush1.xpose.msra.mxu0 0.0
    %272 = vmatprep.subr.mxu0 0.0
    %273 = vmatpush1.xpose.msra.mxu0 0.0
    %274 = vmatprep.subr.mxu0 0.0
    %275 = vmatpush1.xpose.msra.mxu0 0.0
    %276 = vmatprep.subr.mxu0 0.0
    %277 = vmatpush1.xpose.msra.mxu0 0.0
    %278 = vmatprep.subr.mxu0 0.0
    %279 = vmatpush1.xpose.msra.mxu0 0.0
    %280 = vmatprep.subr.mxu0 0.0
    %281 = vmatpush1.xpose.msra.mxu0 0.0
    %282 = vmatprep.subr.mxu0 0.0
    %283 = vmatpush1.xpose.msra.mxu0 0.0
    %284 = vmatprep.subr.mxu0 0.0
    %285 = vmatpush1.xpose.msra.mxu0 0.0
    %286 = vmatprep.subr.mxu0 0.0
    %287 = vmatpush1.xpose.msra.mxu0 0.0
    %288 = vmatprep.subr.mxu0 0.0
    %289 = vmatpush1.xpose.msra.mxu0 0.0
    %290 = vmatprep.subr.mxu0 0.0
    %291 = vmatpush1.xpose.msra.mxu0 0.0
    %292 = vmatprep.subr.mxu0 0.0
    %293 = vmatpush1.xpose.msra.mxu0 0.0
    %294 = vmatprep.subr.mxu0 0.0
    %295 = vmatpush1.xpose.msra.mxu0 0.0
    %296 = vmatprep.subr.mxu0 0.0
    %297 = vmatpush1.xpose.msra.mxu0 0.0
    %298 = vmatprep.subr.mxu0 0.0
    %299 = vmatpush1.xpose.msra.mxu0 0.0
    %300 = vmatprep.subr.mxu0 0.0
    %301 = vmatpush1.xpose.msra.mxu0 0.0
    %302 = vmatprep.subr.mxu0 0.0
    %303 = vmatpush1.xpose.msra.mxu0 0.0
    %304 = vmatprep.subr.mxu0 0.0
    %305 = vmatpush1.xpose.msra.mxu0 0.0
    %306 = vmatprep.subr.mxu0 0.0
    %307 = vmatpush1.xpose.msra.mxu0 0.0
    %308 = vmatprep.subr.mxu0 0.0
    %309 = vmatpush1.xpose.msra.mxu0 0.0
    %310 = vmatprep.subr.mxu0 0.0
    %311 = vmatpush1.xpose.msra.mxu0 0.0
    %312 = vmatprep.subr.mxu0 0.0
    %313 = vmatpush1.xpose.msra.mxu0 0.0
    %314 = vmatprep.subr.mxu0 0.0
    %315 = vmatpush1.xpose.msra.mxu0 0.0
    %316 = vmatprep.subr.mxu0 0.0
    %317 = vmatpush1.xpose.msra.mxu0 0.0
    %318 = vmatprep.subr.mxu0 0.0
    %319 = vmatpush1.xpose.msra.mxu0 0.0
    %320 = vmatprep.subr.mxu0 0.0
    %321 = vmatpush1.xpose.msra.mxu0 0.0
    %322 = vmatprep.subr.mxu0 0.0
    %323 = vmatpush1.xpose.msra.mxu0 0.0
    %324 = vmatprep.subr.mxu0 0.0
    %325 = vmatpush1.xpose.msra.mxu0 0.0
    %326 = vmatprep.subr.mxu0 0.0
    %327 = vmatpush1.xpose.msra.mxu0 0.0
    %328 = vmatprep.subr.mxu0 0.0
    %329 = vmatpush1.xpose.msra.mxu0 0.0
    %330 = vmatprep.mubr.f32.mxu0 0.0
    %331 = vmatmul.mubr.f32.gmra.mrb[0].mxu0 %v262
    %v332 = vpop.f32.mrb[0].mxu0
    %v333 = vadd.f32 %v250, %v332
    %v334 = vpop.f32.mrb[0].mxu0
    %335 = vdwg.mxu0
    %337 = vrot.lane.b32.xlu0 %v236, 96
    %v338 = vpop.permute.xlu0 %337
    %v340 = vsel %vm260, %v240, 0
    %v342 = vsel %vm260, %v338, 0
    %344 = vmatprep.subr.mxu0 0.0
    %345 = vmatpush1.xpose.msra.mxu0 %v342
    %346 = vmatprep.subr.mxu0 0.0
    %347 = vmatpush1.xpose.msra.mxu0 0.0
    %348 = vmatprep.subr.mxu0 0.0
    %349 = vmatpush1.xpose.msra.mxu0 0.0
    %350 = vmatprep.subr.mxu0 0.0
    %351 = vmatpush1.xpose.msra.mxu0 0.0
    %352 = vmatprep.subr.mxu0 0.0
    %353 = vmatpush1.xpose.msra.mxu0 0.0
    %354 = vmatprep.subr.mxu0 0.0
    %355 = vmatpush1.xpose.msra.mxu0 0.0
    %356 = vmatprep.subr.mxu0 0.0
    %357 = vmatpush1.xpose.msra.mxu0 0.0
    %358 = vmatprep.subr.mxu0 0.0
    %359 = vmatpush1.xpose.msra.mxu0 0.0
    %360 = vmatprep.subr.mxu0 0.0
    %361 = vmatpush1.xpose.msra.mxu0 0.0
    %362 = vmatprep.subr.mxu0 0.0
    %363 = vmatpush1.xpose.msra.mxu0 0.0
    %364 = vmatprep.subr.mxu0 0.0
    %365 = vmatpush1.xpose.msra.mxu0 0.0
    %366 = vmatprep.subr.mxu0 0.0
    %367 = vmatpush1.xpose.msra.mxu0 0.0
    %368 = vmatprep.subr.mxu0 0.0
    %369 = vmatpush1.xpose.msra.mxu0 0.0
    %370 = vmatprep.subr.mxu0 0.0
    %371 = vmatpush1.xpose.msra.mxu0 0.0
    %372 = vmatprep.subr.mxu0 0.0
    %373 = vmatpush1.xpose.msra.mxu0 0.0
    %374 = vmatprep.subr.mxu0 0.0
    %375 = vmatpush1.xpose.msra.mxu0 0.0
    %376 = vmatprep.subr.mxu0 0.0
    %377 = vmatpush1.xpose.msra.mxu0 0.0
    %378 = vmatprep.subr.mxu0 0.0
    %379 = vmatpush1.xpose.msra.mxu0 0.0
    %380 = vmatprep.subr.mxu0 0.0
    %381 = vmatpush1.xpose.msra.mxu0 0.0
    %382 = vmatprep.subr.mxu0 0.0
    %383 = vmatpush1.xpose.msra.mxu0 0.0
    %384 = vmatprep.subr.mxu0 0.0
    %385 = vmatpush1.xpose.msra.mxu0 0.0
    %386 = vmatprep.subr.mxu0 0.0
    %387 = vmatpush1.xpose.msra.mxu0 0.0
    %388 = vmatprep.subr.mxu0 0.0
    %389 = vmatpush1.xpose.msra.mxu0 0.0
    %390 = vmatprep.subr.mxu0 0.0
    %391 = vmatpush1.xpose.msra.mxu0 0.0
    %392 = vmatprep.subr.mxu0 0.0
    %393 = vmatpush1.xpose.msra.mxu0 0.0
    %394 = vmatprep.subr.mxu0 0.0
    %395 = vmatpush1.xpose.msra.mxu0 0.0
    %396 = vmatprep.subr.mxu0 0.0
    %397 = vmatpush1.xpose.msra.mxu0 0.0
    %398 = vmatprep.subr.mxu0 0.0
    %399 = vmatpush1.xpose.msra.mxu0 0.0
    %400 = vmatprep.subr.mxu0 0.0
    %401 = vmatpush1.xpose.msra.mxu0 0.0
    %402 = vmatprep.subr.mxu0 0.0
    %403 = vmatpush1.xpose.msra.mxu0 0.0
    %404 = vmatprep.subr.mxu0 0.0
    %405 = vmatpush1.xpose.msra.mxu0 0.0
    %406 = vmatprep.subr.mxu0 0.0
    %407 = vmatpush1.xpose.msra.mxu0 0.0
    %408 = vmatprep.mubr.f32.mxu0 0.0
    %409 = vmatmul.mubr.f32.gmra.mrb[0].mxu0 %v340
    %v410 = vpop.f32.mrb[0].mxu0
    %v411 = vadd.f32 %v254, %v410
    %v412 = vpop.f32.mrb[0].mxu0
    %413 = vdwg.mxu0
    %v414 = vsel %vm260, %v333, -inf
    %415 = vmax.xlane.f32.xlu0 %v414
    %v416 = vpop.xlane.xlu0 %415
    %v417 = vsel %vm260, %v411, -inf
    %418 = vmax.xlane.f32.xlu0 %v417
    %v419 = vpop.xlane.xlu0 %418
    %v420 = vsub.f32 %v333, %v416
    %v421 = vsub.f32 %v411, %v419
    %v422 = vmul.f32 %v420, 1.442695
    %v423 = vpow.pop %v422
    %v424 = vmul.f32 %v421, 1.442695
    %v425 = vpow.pop %v424
    %v426 = vsel %vm260, %v423, 0.0
    %427 = vadd.xlane.f32.xlu0 %v426
    %v428 = vpop.xlane.xlu0 %427
    %v429 = vsel %vm260, %v425, 0.0
    %430 = vadd.xlane.f32.xlu0 %v429
    %v431 = vpop.xlane.xlu0 %430
    %v432 = vrcp.pop %v428
    %v433 = vrcp.pop %v431
    %v434 = vmul.f32 %v423, %v432
    %v435 = vmul.f32 %v425, %v433
    %436 = vrot.lane.b32.xlu0 %v231, 64
    %v437 = vpop.permute.xlu0 %436
    %v440 = vsel %vm260, %v434, 0
    %442 = vmatprep.subr.mxu0 0.0
    %443 = vmatpush1.msra.mxu0 %v437
    %444 = vmatprep.subr.mxu0 0.0
    %445 = vmatpush1.msra.mxu0 0.0
    %446 = vmatprep.subr.mxu0 0.0
    %447 = vmatpush1.msra.mxu0 0.0
    %448 = vmatprep.subr.mxu0 0.0
    %449 = vmatpush1.msra.mxu0 0.0
    %450 = vmatprep.subr.mxu0 0.0
    %451 = vmatpush1.msra.mxu0 0.0
    %452 = vmatprep.subr.mxu0 0.0
    %453 = vmatpush1.msra.mxu0 0.0
    %454 = vmatprep.subr.mxu0 0.0
    %455 = vmatpush1.msra.mxu0 0.0
    %456 = vmatprep.subr.mxu0 0.0
    %457 = vmatpush1.msra.mxu0 0.0
    %458 = vmatprep.subr.mxu0 0.0
    %459 = vmatpush1.msra.mxu0 0.0
    %460 = vmatprep.subr.mxu0 0.0
    %461 = vmatpush1.msra.mxu0 0.0
    %462 = vmatprep.subr.mxu0 0.0
    %463 = vmatpush1.msra.mxu0 0.0
    %464 = vmatprep.subr.mxu0 0.0
    %465 = vmatpush1.msra.mxu0 0.0
    %466 = vmatprep.subr.mxu0 0.0
    %467 = vmatpush1.msra.mxu0 0.0
    %468 = vmatprep.subr.mxu0 0.0
    %469 = vmatpush1.msra.mxu0 0.0
    %470 = vmatprep.subr.mxu0 0.0
    %471 = vmatpush1.msra.mxu0 0.0
    %472 = vmatprep.subr.mxu0 0.0
    %473 = vmatpush1.msra.mxu0 0.0
    %474 = vmatprep.subr.mxu0 0.0
    %475 = vmatpush1.msra.mxu0 0.0
    %476 = vmatprep.subr.mxu0 0.0
    %477 = vmatpush1.msra.mxu0 0.0
    %478 = vmatprep.subr.mxu0 0.0
    %479 = vmatpush1.msra.mxu0 0.0
    %480 = vmatprep.subr.mxu0 0.0
    %481 = vmatpush1.msra.mxu0 0.0
    %482 = vmatprep.subr.mxu0 0.0
    %483 = vmatpush1.msra.mxu0 0.0
    %484 = vmatprep.subr.mxu0 0.0
    %485 = vmatpush1.msra.mxu0 0.0
    %486 = vmatprep.subr.mxu0 0.0
    %487 = vmatpush1.msra.mxu0 0.0
    %488 = vmatprep.subr.mxu0 0.0
    %489 = vmatpush1.msra.mxu0 0.0
    %490 = vmatprep.subr.mxu0 0.0
    %491 = vmatpush1.msra.mxu0 0.0
    %492 = vmatprep.subr.mxu0 0.0
    %493 = vmatpush1.msra.mxu0 0.0
    %494 = vmatprep.subr.mxu0 0.0
    %495 = vmatpush1.msra.mxu0 0.0
    %496 = vmatprep.subr.mxu0 0.0
    %497 = vmatpush1.msra.mxu0 0.0
    %498 = vmatprep.subr.mxu0 0.0
    %499 = vmatpush1.msra.mxu0 0.0
    %500 = vmatprep.subr.mxu0 0.0
    %501 = vmatpush1.msra.mxu0 0.0
    %502 = vmatprep.subr.mxu0 0.0
    %503 = vmatpush1.msra.mxu0 0.0
    %504 = vmatprep.subr.mxu0 0.0
    %505 = vmatpush1.msra.mxu0 0.0
    %506 = vmatprep.mubr.f32.mxu0 0.0
    %507 = vmatmul.mubr.f32.gmra.mrb[0].mxu0 %v440
    %v508 = vpop.f32.mrb[0].mxu0
    %v509 = vadd.f32 0.0, %v508
    %v510 = vpop.f32.mrb[0].mxu0
    %511 = vdwg.mxu0
    %512 = vrot.lane.b32.xlu0 %v236, 64
    %v513 = vpop.permute.xlu0 %512
    %v516 = vsel %vm260, %v435, 0
    %518 = vmatprep.subr.mxu0 0.0
    %519 = vmatpush1.msra.mxu0 %v513
    %520 = vmatprep.subr.mxu0 0.0
    %521 = vmatpush1.msra.mxu0 0.0
    %522 = vmatprep.subr.mxu0 0.0
    %523 = vmatpush1.msra.mxu0 0.0
    %524 = vmatprep.subr.mxu0 0.0
    %525 = vmatpush1.msra.mxu0 0.0
    %526 = vmatprep.subr.mxu0 0.0
    %527 = vmatpush1.msra.mxu0 0.0
    %528 = vmatprep.subr.mxu0 0.0
    %529 = vmatpush1.msra.mxu0 0.0
    %530 = vmatprep.subr.mxu0 0.0
    %531 = vmatpush1.msra.mxu0 0.0
    %532 = vmatprep.subr.mxu0 0.0
    %533 = vmatpush1.msra.mxu0 0.0
    %534 = vmatprep.subr.mxu0 0.0
    %535 = vmatpush1.msra.mxu0 0.0
    %536 = vmatprep.subr.mxu0 0.0
    %537 = vmatpush1.msra.mxu0 0.0
    %538 = vmatprep.subr.mxu0 0.0
    %539 = vmatpush1.msra.mxu0 0.0
    %540 = vmatprep.subr.mxu0 0.0
    %541 = vmatpush1.msra.mxu0 0.0
    %542 = vmatprep.subr.mxu0 0.0
    %543 = vmatpush1.msra.mxu0 0.0
    %544 = vmatprep.subr.mxu0 0.0
    %545 = vmatpush1.msra.mxu0 0.0
    %546 = vmatprep.subr.mxu0 0.0
    %547 = vmatpush1.msra.mxu0 0.0
    %548 = vmatprep.subr.mxu0 0.0
    %549 = vmatpush1.msra.mxu0 0.0
    %550 = vmatprep.subr.mxu0 0.0
    %551 = vmatpush1.msra.mxu0 0.0
    %552 = vmatprep.subr.mxu0 0.0
    %553 = vmatpush1.msra.mxu0 0.0
    %554 = vmatprep.subr.mxu0 0.0
    %555 = vmatpush1.msra.mxu0 0.0
    %556 = vmatprep.subr.mxu0 0.0
    %557 = vmatpush1.msra.mxu0 0.0
    %558 = vmatprep.subr.mxu0 0.0
    %559 = vmatpush1.msra.mxu0 0.0
    %560 = vmatprep.subr.mxu0 0.0
    %561 = vmatpush1.msra.mxu0 0.0
    %562 = vmatprep.subr.mxu0 0.0
    %563 = vmatpush1.msra.mxu0 0.0
    %564 = vmatprep.subr.mxu0 0.0
    %565 = vmatpush1.msra.mxu0 0.0
    %566 = vmatprep.subr.mxu0 0.0
    %567 = vmatpush1.msra.mxu0 0.0
    %568 = vmatprep.subr.mxu0 0.0
    %569 = vmatpush1.msra.mxu0 0.0
    %570 = vmatprep.subr.mxu0 0.0
    %571 = vmatpush1.msra.mxu0 0.0
    %572 = vmatprep.subr.mxu0 0.0
    %573 = vmatpush1.msra.mxu0 0.0
    %574 = vmatprep.subr.mxu0 0.0
    %575 = vmatpush1.msra.mxu0 0.0
    %576 = vmatprep.subr.mxu0 0.0
    %577 = vmatpush1.msra.mxu0 0.0
    %578 = vmatprep.subr.mxu0 0.0
    %579 = vmatpush1.msra.mxu0 0.0
    %580 = vmatprep.subr.mxu0 0.0
    %581 = vmatpush1.msra.mxu0 0.0
    %582 = vmatprep.mubr.f32.mxu0 0.0
    %583 = vmatmul.mubr.f32.gmra.mrb[0].mxu0 %v516
    %v584 = vpop.f32.mrb[0].mxu0
    %v585 = vadd.f32 0.0, %v584
    %v586 = vpop.f32.mrb[0].mxu0
    %587 = vdwg.mxu0
    %588 = vrot.lane.b32.xlu0 %v239, 120
    %v589 = vpop.permute.xlu0 %588
    %590 = vrot.lane.b32.xlu0 %v231, 88
    %v591 = vpop.permute.xlu0 %590
    %v592 = vsel %vm260, %v589, 0
    %v594 = vsel %vm260, %v591, 0
    %596 = vmatprep.subr.mxu0 0.0
    %597 = vmatpush1.xpose.msra.mxu0 %v594
    %598 = vmatprep.subr.mxu0 0.0
    %599 = vmatpush1.xpose.msra.mxu0 0.0
    %600 = vmatprep.subr.mxu0 0.0
    %601 = vmatpush1.xpose.msra.mxu0 0.0
    %602 = vmatprep.subr.mxu0 0.0
    %603 = vmatpush1.xpose.msra.mxu0 0.0
    %604 = vmatprep.subr.mxu0 0.0
    %605 = vmatpush1.xpose.msra.mxu0 0.0
    %606 = vmatprep.subr.mxu0 0.0
    %607 = vmatpush1.xpose.msra.mxu0 0.0
    %608 = vmatprep.subr.mxu0 0.0
    %609 = vmatpush1.xpose.msra.mxu0 0.0
    %610 = vmatprep.subr.mxu0 0.0
    %611 = vmatpush1.xpose.msra.mxu0 0.0
    %612 = vmatprep.subr.mxu0 0.0
    %613 = vmatpush1.xpose.msra.mxu0 0.0
    %614 = vmatprep.subr.mxu0 0.0
    %615 = vmatpush1.xpose.msra.mxu0 0.0
    %616 = vmatprep.subr.mxu0 0.0
    %617 = vmatpush1.xpose.msra.mxu0 0.0
    %618 = vmatprep.subr.mxu0 0.0
    %619 = vmatpush1.xpose.msra.mxu0 0.0
    %620 = vmatprep.subr.mxu0 0.0
    %621 = vmatpush1.xpose.msra.mxu0 0.0
    %622 = vmatprep.subr.mxu0 0.0
    %623 = vmatpush1.xpose.msra.mxu0 0.0
    %624 = vmatprep.subr.mxu0 0.0
    %625 = vmatpush1.xpose.msra.mxu0 0.0
    %626 = vmatprep.subr.mxu0 0.0
    %627 = vmatpush1.xpose.msra.mxu0 0.0
    %628 = vmatprep.subr.mxu0 0.0
    %629 = vmatpush1.xpose.msra.mxu0 0.0
    %630 = vmatprep.subr.mxu0 0.0
    %631 = vmatpush1.xpose.msra.mxu0 0.0
    %632 = vmatprep.subr.mxu0 0.0
    %633 = vmatpush1.xpose.msra.mxu0 0.0
    %634 = vmatprep.subr.mxu0 0.0
    %635 = vmatpush1.xpose.msra.mxu0 0.0
    %636 = vmatprep.subr.mxu0 0.0
    %637 = vmatpush1.xpose.msra.mxu0 0.0
    %638 = vmatprep.subr.mxu0 0.0
    %639 = vmatpush1.xpose.msra.mxu0 0.0
    %640 = vmatprep.subr.mxu0 0.0
    %641 = vmatpush1.xpose.msra.mxu0 0.0
    %642 = vmatprep.subr.mxu0 0.0
    %643 = vmatpush1.xpose.msra.mxu0 0.0
    %644 = vmatprep.subr.mxu0 0.0
    %645 = vmatpush1.xpose.msra.mxu0 0.0
    %646 = vmatprep.subr.mxu0 0.0
    %647 = vmatpush1.xpose.msra.mxu0 0.0
    %648 = vmatprep.subr.mxu0 0.0
    %649 = vmatpush1.xpose.msra.mxu0 0.0
    %650 = vmatprep.subr.mxu0 0.0
    %651 = vmatpush1.xpose.msra.mxu0 0.0
    %652 = vmatprep.subr.mxu0 0.0
    %653 = vmatpush1.xpose.msra.mxu0 0.0
    %654 = vmatprep.subr.mxu0 0.0
    %655 = vmatpush1.xpose.msra.mxu0 0.0
    %656 = vmatprep.subr.mxu0 0.0
    %657 = vmatpush1.xpose.msra.mxu0 0.0
    %658 = vmatprep.subr.mxu0 0.0
    %659 = vmatpush1.xpose.msra.mxu0 0.0
    %660 = vmatprep.mubr.f32.mxu0 0.0
    %661 = vmatmul.mubr.f32.gmra.mrb[0].mxu0 %v592
    %v662 = vpop.f32.mrb[0].mxu0
    %v663 = vadd.f32 %v250, %v662
    %v664 = vpop.f32.mrb[0].mxu0
    %665 = vdwg.mxu0
    %666 = vrot.lane.b32.xlu0 %v240, 120
    %v667 = vpop.permute.xlu0 %666
    %668 = vrot.lane.b32.xlu0 %v236, 88
    %v669 = vpop.permute.xlu0 %668
    %v670 = vsel %vm260, %v667, 0
    %v672 = vsel %vm260, %v669, 0
    %674 = vmatprep.subr.mxu0 0.0
    %675 = vmatpush1.xpose.msra.mxu0 %v672
    %676 = vmatprep.subr.mxu0 0.0
    %677 = vmatpush1.xpose.msra.mxu0 0.0
    %678 = vmatprep.subr.mxu0 0.0
    %679 = vmatpush1.xpose.msra.mxu0 0.0
    %680 = vmatprep.subr.mxu0 0.0
    %681 = vmatpush1.xpose.msra.mxu0 0.0
    %682 = vmatprep.subr.mxu0 0.0
    %683 = vmatpush1.xpose.msra.mxu0 0.0
    %684 = vmatprep.subr.mxu0 0.0
    %685 = vmatpush1.xpose.msra.mxu0 0.0
    %686 = vmatprep.subr.mxu0 0.0
    %687 = vmatpush1.xpose.msra.mxu0 0.0
    %688 = vmatprep.subr.mxu0 0.0
    %689 = vmatpush1.xpose.msra.mxu0 0.0
    %690 = vmatprep.subr.mxu0 0.0
    %691 = vmatpush1.xpose.msra.mxu0 0.0
    %692 = vmatprep.subr.mxu0 0.0
    %693 = vmatpush1.xpose.msra.mxu0 0.0
    %694 = vmatprep.subr.mxu0 0.0
    %695 = vmatpush1.xpose.msra.mxu0 0.0
    %696 = vmatprep.subr.mxu0 0.0
    %697 = vmatpush1.xpose.msra.mxu0 0.0
    %698 = vmatprep.subr.mxu0 0.0
    %699 = vmatpush1.xpose.msra.mxu0 0.0
    %700 = vmatprep.subr.mxu0 0.0
    %701 = vmatpush1.xpose.msra.mxu0 0.0
    %702 = vmatprep.subr.mxu0 0.0
    %703 = vmatpush1.xpose.msra.mxu0 0.0
    %704 = vmatprep.subr.mxu0 0.0
    %705 = vmatpush1.xpose.msra.mxu0 0.0
    %706 = vmatprep.subr.mxu0 0.0
    %707 = vmatpush1.xpose.msra.mxu0 0.0
    %708 = vmatprep.subr.mxu0 0.0
    %709 = vmatpush1.xpose.msra.mxu0 0.0
    %710 = vmatprep.subr.mxu0 0.0
    %711 = vmatpush1.xpose.msra.mxu0 0.0
    %712 = vmatprep.subr.mxu0 0.0
    %713 = vmatpush1.xpose.msra.mxu0 0.0
    %714 = vmatprep.subr.mxu0 0.0
    %715 = vmatpush1.xpose.msra.mxu0 0.0
    %716 = vmatprep.subr.mxu0 0.0
    %717 = vmatpush1.xpose.msra.mxu0 0.0
    %718 = vmatprep.subr.mxu0 0.0
    %719 = vmatpush1.xpose.msra.mxu0 0.0
    %720 = vmatprep.subr.mxu0 0.0
    %721 = vmatpush1.xpose.msra.mxu0 0.0
    %722 = vmatprep.subr.mxu0 0.0
    %723 = vmatpush1.xpose.msra.mxu0 0.0
    %724 = vmatprep.subr.mxu0 0.0
    %725 = vmatpush1.xpose.msra.mxu0 0.0
    %726 = vmatprep.subr.mxu0 0.0
    %727 = vmatpush1.xpose.msra.mxu0 0.0
    %728 = vmatprep.subr.mxu0 0.0
    %729 = vmatpush1.xpose.msra.mxu0 0.0
    %730 = vmatprep.subr.mxu0 0.0
    %731 = vmatpush1.xpose.msra.mxu0 0.0
    %732 = vmatprep.subr.mxu0 0.0
    %733 = vmatpush1.xpose.msra.mxu0 0.0
    %734 = vmatprep.subr.mxu0 0.0
    %735 = vmatpush1.xpose.msra.mxu0 0.0
    %736 = vmatprep.subr.mxu0 0.0
    %737 = vmatpush1.xpose.msra.mxu0 0.0
    %738 = vmatprep.mubr.f32.mxu0 0.0
    %739 = vmatmul.mubr.f32.gmra.mrb[0].mxu0 %v670
    %v740 = vpop.f32.mrb[0].mxu0
    %v741 = vadd.f32 %v254, %v740
    %v742 = vpop.f32.mrb[0].mxu0
    %743 = vdwg.mxu0
    %v744 = vsel %vm260, %v663, -inf
    %745 = vmax.xlane.f32.xlu0 %v744
    %v746 = vpop.xlane.xlu0 %745
    %v747 = vsel %vm260, %v741, -inf
    %748 = vmax.xlane.f32.xlu0 %v747
    %v749 = vpop.xlane.xlu0 %748
    %v750 = vsub.f32 %v663, %v746
    %v751 = vsub.f32 %v741, %v749
    %v752 = vmul.f32 %v750, 1.442695
    %v753 = vpow.pop %v752
    %v754 = vmul.f32 %v751, 1.442695
    %v755 = vpow.pop %v754
    %v756 = vsel %vm260, %v753, 0.0
    %757 = vadd.xlane.f32.xlu0 %v756
    %v758 = vpop.xlane.xlu0 %757
    %v759 = vsel %vm260, %v755, 0.0
    %760 = vadd.xlane.f32.xlu0 %v759
    %v761 = vpop.xlane.xlu0 %760
    %v762 = vrcp.pop %v758
    %v763 = vrcp.pop %v761
    %v764 = vmul.f32 %v753, %v762
    %v765 = vmul.f32 %v755, %v763
    %766 = vrot.lane.b32.xlu0 %v231, 56
    %v767 = vpop.permute.xlu0 %766
    %v770 = vsel %vm260, %v764, 0
    %772 = vmatprep.subr.mxu0 0.0
    %773 = vmatpush1.msra.mxu0 %v767
    %774 = vmatprep.subr.mxu0 0.0
    %775 = vmatpush1.msra.mxu0 0.0
    %776 = vmatprep.subr.mxu0 0.0
    %777 = vmatpush1.msra.mxu0 0.0
    %778 = vmatprep.subr.mxu0 0.0
    %779 = vmatpush1.msra.mxu0 0.0
    %780 = vmatprep.subr.mxu0 0.0
    %781 = vmatpush1.msra.mxu0 0.0
    %782 = vmatprep.subr.mxu0 0.0
    %783 = vmatpush1.msra.mxu0 0.0
    %784 = vmatprep.subr.mxu0 0.0
    %785 = vmatpush1.msra.mxu0 0.0
    %786 = vmatprep.subr.mxu0 0.0
    %787 = vmatpush1.msra.mxu0 0.0
    %788 = vmatprep.subr.mxu0 0.0
    %789 = vmatpush1.msra.mxu0 0.0
    %790 = vmatprep.subr.mxu0 0.0
    %791 = vmatpush1.msra.mxu0 0.0
    %792 = vmatprep.subr.mxu0 0.0
    %793 = vmatpush1.msra.mxu0 0.0
    %794 = vmatprep.subr.mxu0 0.0
    %795 = vmatpush1.msra.mxu0 0.0
    %796 = vmatprep.subr.mxu0 0.0
    %797 = vmatpush1.msra.mxu0 0.0
    %798 = vmatprep.subr.mxu0 0.0
    %799 = vmatpush1.msra.mxu0 0.0
    %800 = vmatprep.subr.mxu0 0.0
    %801 = vmatpush1.msra.mxu0 0.0
    %802 = vmatprep.subr.mxu0 0.0
    %803 = vmatpush1.msra.mxu0 0.0
    %804 = vmatprep.subr.mxu0 0.0
    %805 = vmatpush1.msra.mxu0 0.0
    %806 = vmatprep.subr.mxu0 0.0
    %807 = vmatpush1.msra.mxu0 0.0
    %808 = vmatprep.subr.mxu0 0.0
    %809 = vmatpush1.msra.mxu0 0.0
    %810 = vmatprep.subr.mxu0 0.0
    %811 = vmatpush1.msra.mxu0 0.0
    %812 = vmatprep.subr.mxu0 0.0
    %813 = vmatpush1.msra.mxu0 0.0
    %814 = vmatprep.subr.mxu0 0.0
    %815 = vmatpush1.msra.mxu0 0.0
    %816 = vmatprep.subr.mxu0 0.0
    %817 = vmatpush1.msra.mxu0 0.0
    %818 = vmatprep.subr.mxu0 0.0
    %819 = vmatpush1.msra.mxu0 0.0
    %820 = vmatprep.subr.mxu0 0.0
    %821 = vmatpush1.msra.mxu0 0.0
    %822 = vmatprep.subr.mxu0 0.0
    %823 = vmatpush1.msra.mxu0 0.0
    %824 = vmatprep.subr.mxu0 0.0
    %825 = vmatpush1.msra.mxu0 0.0
    %826 = vmatprep.subr.mxu0 0.0
    %827 = vmatpush1.msra.mxu0 0.0
    %828 = vmatprep.subr.mxu0 0.0
    %829 = vmatpush1.msra.mxu0 0.0
    %830 = vmatprep.subr.mxu0 0.0
    %831 = vmatpush1.msra.mxu0 0.0
    %832 = vmatprep.subr.mxu0 0.0
    %833 = vmatpush1.msra.mxu0 0.0
    %834 = vmatprep.subr.mxu0 0.0
    %835 = vmatpush1.msra.mxu0 0.0
    %836 = vmatprep.mubr.f32.mxu0 0.0
    %837 = vmatmul.mubr.f32.gmra.mrb[0].mxu0 %v770
    %v838 = vpop.f32.mrb[0].mxu0
    %v839 = vadd.f32 0.0, %v838
    %v840 = vpop.f32.mrb[0].mxu0
    %841 = vdwg.mxu0
    %842 = vrot.lane.b32.xlu0 %v236, 56
    %v843 = vpop.permute.xlu0 %842
    %v846 = vsel %vm260, %v765, 0
    %848 = vmatprep.subr.mxu0 0.0
    %849 = vmatpush1.msra.mxu0 %v843
    %850 = vmatprep.subr.mxu0 0.0
    %851 = vmatpush1.msra.mxu0 0.0
    %852 = vmatprep.subr.mxu0 0.0
    %853 = vmatpush1.msra.mxu0 0.0
    %854 = vmatprep.subr.mxu0 0.0
    %855 = vmatpush1.msra.mxu0 0.0
    %856 = vmatprep.subr.mxu0 0.0
    %857 = vmatpush1.msra.mxu0 0.0
    %858 = vmatprep.subr.mxu0 0.0
    %859 = vmatpush1.msra.mxu0 0.0
    %860 = vmatprep.subr.mxu0 0.0
    %861 = vmatpush1.msra.mxu0 0.0
    %862 = vmatprep.subr.mxu0 0.0
    %863 = vmatpush1.msra.mxu0 0.0
    %864 = vmatprep.subr.mxu0 0.0
    %865 = vmatpush1.msra.mxu0 0.0
    %866 = vmatprep.subr.mxu0 0.0
    %867 = vmatpush1.msra.mxu0 0.0
    %868 = vmatprep.subr.mxu0 0.0
    %869 = vmatpush1.msra.mxu0 0.0
    %870 = vmatprep.subr.mxu0 0.0
    %871 = vmatpush1.msra.mxu0 0.0
    %872 = vmatprep.subr.mxu0 0.0
    %873 = vmatpush1.msra.mxu0 0.0
    %874 = vmatprep.subr.mxu0 0.0
    %875 = vmatpush1.msra.mxu0 0.0
    %876 = vmatprep.subr.mxu0 0.0
    %877 = vmatpush1.msra.mxu0 0.0
    %878 = vmatprep.subr.mxu0 0.0
    %879 = vmatpush1.msra.mxu0 0.0
    %880 = vmatprep.subr.mxu0 0.0
    %881 = vmatpush1.msra.mxu0 0.0
    %882 = vmatprep.subr.mxu0 0.0
    %883 = vmatpush1.msra.mxu0 0.0
    %884 = vmatprep.subr.mxu0 0.0
    %885 = vmatpush1.msra.mxu0 0.0
    %886 = vmatprep.subr.mxu0 0.0
    %887 = vmatpush1.msra.mxu0 0.0
    %888 = vmatprep.subr.mxu0 0.0
    %889 = vmatpush1.msra.mxu0 0.0
    %890 = vmatprep.subr.mxu0 0.0
    %891 = vmatpush1.msra.mxu0 0.0
    %892 = vmatprep.subr.mxu0 0.0
    %893 = vmatpush1.msra.mxu0 0.0
    %894 = vmatprep.subr.mxu0 0.0
    %895 = vmatpush1.msra.mxu0 0.0
    %896 = vmatprep.subr.mxu0 0.0
    %897 = vmatpush1.msra.mxu0 0.0
    %898 = vmatprep.subr.mxu0 0.0
    %899 = vmatpush1.msra.mxu0 0.0
    %900 = vmatprep.subr.mxu0 0.0
    %901 = vmatpush1.msra.mxu0 0.0
    %902 = vmatprep.subr.mxu0 0.0
    %903 = vmatpush1.msra.mxu0 0.0
    %904 = vmatprep.subr.mxu0 0.0
    %905 = vmatpush1.msra.mxu0 0.0
    %906 = vmatprep.subr.mxu0 0.0
    %907 = vmatpush1.msra.mxu0 0.0
    %908 = vmatprep.subr.mxu0 0.0
    %909 = vmatpush1.msra.mxu0 0.0
    %910 = vmatprep.subr.mxu0 0.0
    %911 = vmatpush1.msra.mxu0 0.0
    %912 = vmatprep.mubr.f32.mxu0 0.0
    %913 = vmatmul.mubr.f32.gmra.mrb[0].mxu0 %v846
    %v914 = vpop.f32.mrb[0].mxu0
    %v915 = vadd.f32 0.0, %v914
    %v916 = vpop.f32.mrb[0].mxu0
    %917 = vdwg.mxu0
    %918 = vrot.lane.b32.xlu0 %v239, 112
    %v919 = vpop.permute.xlu0 %918
    %920 = vrot.lane.b32.xlu0 %v231, 80
    %v921 = vpop.permute.xlu0 %920
    %v922 = vsel %vm260, %v919, 0
    %v924 = vsel %vm260, %v921, 0
    %926 = vmatprep.subr.mxu0 0.0
    %927 = vmatpush1.xpose.msra.mxu0 %v924
    %928 = vmatprep.subr.mxu0 0.0
    %929 = vmatpush1.xpose.msra.mxu0 0.0
    %930 = vmatprep.subr.mxu0 0.0
    %931 = vmatpush1.xpose.msra.mxu0 0.0
    %932 = vmatprep.subr.mxu0 0.0
    %933 = vmatpush1.xpose.msra.mxu0 0.0
    %934 = vmatprep.subr.mxu0 0.0
    %935 = vmatpush1.xpose.msra.mxu0 0.0
    %936 = vmatprep.subr.mxu0 0.0
    %937 = vmatpush1.xpose.msra.mxu0 0.0
    %938 = vmatprep.subr.mxu0 0.0
    %939 = vmatpush1.xpose.msra.mxu0 0.0
    %940 = vmatprep.subr.mxu0 0.0
    %941 = vmatpush1.xpose.msra.mxu0 0.0
    %942 = vmatprep.subr.mxu0 0.0
    %943 = vmatpush1.xpose.msra.mxu0 0.0
    %944 = vmatprep.subr.mxu0 0.0
    %945 = vmatpush1.xpose.msra.mxu0 0.0
    %946 = vmatprep.subr.mxu0 0.0
    %947 = vmatpush1.xpose.msra.mxu0 0.0
    %948 = vmatprep.subr.mxu0 0.0
    %949 = vmatpush1.xpose.msra.mxu0 0.0
    %950 = vmatprep.subr.mxu0 0.0
    %951 = vmatpush1.xpose.msra.mxu0 0.0
    %952 = vmatprep.subr.mxu0 0.0
    %953 = vmatpush1.xpose.msra.mxu0 0.0
    %954 = vmatprep.subr.mxu0 0.0
    %955 = vmatpush1.xpose.msra.mxu0 0.0
    %956 = vmatprep.subr.mxu0 0.0
    %957 = vmatpush1.xpose.msra.mxu0 0.0
    %958 = vmatprep.subr.mxu0 0.0
    %959 = vmatpush1.xpose.msra.mxu0 0.0
    %960 = vmatprep.subr.mxu0 0.0
    %961 = vmatpush1.xpose.msra.mxu0 0.0
    %962 = vmatprep.subr.mxu0 0.0
    %963 = vmatpush1.xpose.msra.mxu0 0.0
    %964 = vmatprep.subr.mxu0 0.0
    %965 = vmatpush1.xpose.msra.mxu0 0.0
    %966 = vmatprep.subr.mxu0 0.0
    %967 = vmatpush1.xpose.msra.mxu0 0.0
    %968 = vmatprep.subr.mxu0 0.0
    %969 = vmatpush1.xpose.msra.mxu0 0.0
    %970 = vmatprep.subr.mxu0 0.0
    %971 = vmatpush1.xpose.msra.mxu0 0.0
    %972 = vmatprep.subr.mxu0 0.0
    %973 = vmatpush1.xpose.msra.mxu0 0.0
    %974 = vmatprep.subr.mxu0 0.0
    %975 = vmatpush1.xpose.msra.mxu0 0.0
    %976 = vmatprep.subr.mxu0 0.0
    %977 = vmatpush1.xpose.msra.mxu0 0.0
    %978 = vmatprep.subr.mxu0 0.0
    %979 = vmatpush1.xpose.msra.mxu0 0.0
    %980 = vmatprep.subr.mxu0 0.0
    %981 = vmatpush1.xpose.msra.mxu0 0.0
    %982 = vmatprep.subr.mxu0 0.0
    %983 = vmatpush1.xpose.msra.mxu0 0.0
    %984 = vmatprep.subr.mxu0 0.0
    %985 = vmatpush1.xpose.msra.mxu0 0.0
    %986 = vmatprep.subr.mxu0 0.0
    %987 = vmatpush1.xpose.msra.mxu0 0.0
    %988 = vmatprep.subr.mxu0 0.0
    %989 = vmatpush1.xpose.msra.mxu0 0.0
    %990 = vmatprep.mubr.f32.mxu0 0.0
    %991 = vmatmul.mubr.f32.gmra.mrb[0].mxu0 %v922
    %v992 = vpop.f32.mrb[0].mxu0
    %v993 = vadd.f32 %v250, %v992
    %v994 = vpop.f32.mrb[0].mxu0
    %995 = vdwg.mxu0
    %996 = vrot.lane.b32.xlu0 %v240, 112
    %v997 = vpop.permute.xlu0 %996
    %998 = vrot.lane.b32.xlu0 %v236, 80
    %v999 = vpop.permute.xlu0 %998
    %v1000 = vsel %vm260, %v997, 0
    %v1002 = vsel %vm260, %v999, 0
    %1004 = vmatprep.subr.mxu0 0.0
    %1005 = vmatpush1.xpose.msra.mxu0 %v1002
    %1006 = vmatprep.subr.mxu0 0.0
    %1007 = vmatpush1.xpose.msra.mxu0 0.0
    %1008 = vmatprep.subr.mxu0 0.0
    %1009 = vmatpush1.xpose.msra.mxu0 0.0
    %1010 = vmatprep.subr.mxu0 0.0
    %1011 = vmatpush1.xpose.msra.mxu0 0.0
    %1012 = vmatprep.subr.mxu0 0.0
    %1013 = vmatpush1.xpose.msra.mxu0 0.0
    %1014 = vmatprep.subr.mxu0 0.0
    %1015 = vmatpush1.xpose.msra.mxu0 0.0
    %1016 = vmatprep.subr.mxu0 0.0
    %1017 = vmatpush1.xpose.msra.mxu0 0.0
    %1018 = vmatprep.subr.mxu0 0.0
    %1019 = vmatpush1.xpose.msra.mxu0 0.0
    %1020 = vmatprep.subr.mxu0 0.0
    %1021 = vmatpush1.xpose.msra.mxu0 0.0
    %1022 = vmatprep.subr.mxu0 0.0
    %1023 = vmatpush1.xpose.msra.mxu0 0.0
    %1024 = vmatprep.subr.mxu0 0.0
    %1025 = vmatpush1.xpose.msra.mxu0 0.0
    %1026 = vmatprep.subr.mxu0 0.0
    %1027 = vmatpush1.xpose.msra.mxu0 0.0
    %1028 = vmatprep.subr.mxu0 0.0
    %1029 = vmatpush1.xpose.msra.mxu0 0.0
    %1030 = vmatprep.subr.mxu0 0.0
    %1031 = vmatpush1.xpose.msra.mxu0 0.0
    %1032 = vmatprep.subr.mxu0 0.0
    %1033 = vmatpush1.xpose.msra.mxu0 0.0
    %1034 = vmatprep.subr.mxu0 0.0
    %1035 = vmatpush1.xpose.msra.mxu0 0.0
    %1036 = vmatprep.subr.mxu0 0.0
    %1037 = vmatpush1.xpose.msra.mxu0 0.0
    %1038 = vmatprep.subr.mxu0 0.0
    %1039 = vmatpush1.xpose.msra.mxu0 0.0
    %1040 = vmatprep.subr.mxu0 0.0
    %1041 = vmatpush1.xpose.msra.mxu0 0.0
    %1042 = vmatprep.subr.mxu0 0.0
    %1043 = vmatpush1.xpose.msra.mxu0 0.0
    %1044 = vmatprep.subr.mxu0 0.0
    %1045 = vmatpush1.xpose.msra.mxu0 0.0
    %1046 = vmatprep.subr.mxu0 0.0
    %1047 = vmatpush1.xpose.msra.mxu0 0.0
    %1048 = vmatprep.subr.mxu0 0.0
    %1049 = vmatpush1.xpose.msra.mxu0 0.0
    %1050 = vmatprep.subr.mxu0 0.0
    %1051 = vmatpush1.xpose.msra.mxu0 0.0
    %1052 = vmatprep.subr.mxu0 0.0
    %1053 = vmatpush1.xpose.msra.mxu0 0.0
    %1054 = vmatprep.subr.mxu0 0.0
    %1055 = vmatpush1.xpose.msra.mxu0 0.0
    %1056 = vmatprep.subr.mxu0 0.0
    %1057 = vmatpush1.xpose.msra.mxu0 0.0
    %1058 = vmatprep.subr.mxu0 0.0
    %1059 = vmatpush1.xpose.msra.mxu0 0.0
    %1060 = vmatprep.subr.mxu0 0.0
    %1061 = vmatpush1.xpose.msra.mxu0 0.0
    %1062 = vmatprep.subr.mxu0 0.0
    %1063 = vmatpush1.xpose.msra.mxu0 0.0
    %1064 = vmatprep.subr.mxu0 0.0
    %1065 = vmatpush1.xpose.msra.mxu0 0.0
    %1066 = vmatprep.subr.mxu0 0.0
    %1067 = vmatpush1.xpose.msra.mxu0 0.0
    %1068 = vmatprep.mubr.f32.mxu0 0.0
    %1069 = vmatmul.mubr.f32.gmra.mrb[0].mxu0 %v1000
    %v1070 = vpop.f32.mrb[0].mxu0
    %v1071 = vadd.f32 %v254, %v1070
    %v1072 = vpop.f32.mrb[0].mxu0
    %1073 = vdwg.mxu0
    %v1074 = vsel %vm260, %v993, -inf
    %1075 = vmax.xlane.f32.xlu0 %v1074
    %v1076 = vpop.xlane.xlu0 %1075
    %v1077 = vsel %vm260, %v1071, -inf
    %1078 = vmax.xlane.f32.xlu0 %v1077
    %v1079 = vpop.xlane.xlu0 %1078
    %v1080 = vsub.f32 %v993, %v1076
    %v1081 = vsub.f32 %v1071, %v1079
    %v1082 = vmul.f32 %v1080, 1.442695
    %v1083 = vpow.pop %v1082
    %v1084 = vmul.f32 %v1081, 1.442695
    %v1085 = vpow.pop %v1084
    %v1086 = vsel %vm260, %v1083, 0.0
    %1087 = vadd.xlane.f32.xlu0 %v1086
    %v1088 = vpop.xlane.xlu0 %1087
    %v1089 = vsel %vm260, %v1085, 0.0
    %1090 = vadd.xlane.f32.xlu0 %v1089
    %v1091 = vpop.xlane.xlu0 %1090
    %v1092 = vrcp.pop %v1088
    %v1093 = vrcp.pop %v1091
    %v1094 = vmul.f32 %v1083, %v1092
    %v1095 = vmul.f32 %v1085, %v1093
    %1096 = vrot.lane.b32.xlu0 %v231, 48
    %v1097 = vpop.permute.xlu0 %1096
    %v1100 = vsel %vm260, %v1094, 0
    %1102 = vmatprep.subr.mxu0 0.0
    %1103 = vmatpush1.msra.mxu0 %v1097
    %1104 = vmatprep.subr.mxu0 0.0
    %1105 = vmatpush1.msra.mxu0 0.0
    %1106 = vmatprep.subr.mxu0 0.0
    %1107 = vmatpush1.msra.mxu0 0.0
    %1108 = vmatprep.subr.mxu0 0.0
    %1109 = vmatpush1.msra.mxu0 0.0
    %1110 = vmatprep.subr.mxu0 0.0
    %1111 = vmatpush1.msra.mxu0 0.0
    %1112 = vmatprep.subr.mxu0 0.0
    %1113 = vmatpush1.msra.mxu0 0.0
    %1114 = vmatprep.subr.mxu0 0.0
    %1115 = vmatpush1.msra.mxu0 0.0
    %1116 = vmatprep.subr.mxu0 0.0
    %1117 = vmatpush1.msra.mxu0 0.0
    %1118 = vmatprep.subr.mxu0 0.0
    %1119 = vmatpush1.msra.mxu0 0.0
    %1120 = vmatprep.subr.mxu0 0.0
    %1121 = vmatpush1.msra.mxu0 0.0
    %1122 = vmatprep.subr.mxu0 0.0
    %1123 = vmatpush1.msra.mxu0 0.0
    %1124 = vmatprep.subr.mxu0 0.0
    %1125 = vmatpush1.msra.mxu0 0.0
    %1126 = vmatprep.subr.mxu0 0.0
    %1127 = vmatpush1.msra.mxu0 0.0
    %1128 = vmatprep.subr.mxu0 0.0
    %1129 = vmatpush1.msra.mxu0 0.0
    %1130 = vmatprep.subr.mxu0 0.0
    %1131 = vmatpush1.msra.mxu0 0.0
    %1132 = vmatprep.subr.mxu0 0.0
    %1133 = vmatpush1.msra.mxu0 0.0
    %1134 = vmatprep.subr.mxu0 0.0
    %1135 = vmatpush1.msra.mxu0 0.0
    %1136 = vmatprep.subr.mxu0 0.0
    %1137 = vmatpush1.msra.mxu0 0.0
    %1138 = vmatprep.subr.mxu0 0.0
    %1139 = vmatpush1.msra.mxu0 0.0
    %1140 = vmatprep.subr.mxu0 0.0
    %1141 = vmatpush1.msra.mxu0 0.0
    %1142 = vmatprep.subr.mxu0 0.0
    %1143 = vmatpush1.msra.mxu0 0.0
    %1144 = vmatprep.subr.mxu0 0.0
    %1145 = vmatpush1.msra.mxu0 0.0
    %1146 = vmatprep.subr.mxu0 0.0
    %1147 = vmatpush1.msra.mxu0 0.0
    %1148 = vmatprep.subr.mxu0 0.0
    %1149 = vmatpush1.msra.mxu0 0.0
    %1150 = vmatprep.subr.mxu0 0.0
    %1151 = vmatpush1.msra.mxu0 0.0
    %1152 = vmatprep.subr.mxu0 0.0
    %1153 = vmatpush1.msra.mxu0 0.0
    %1154 = vmatprep.subr.mxu0 0.0
    %1155 = vmatpush1.msra.mxu0 0.0
    %1156 = vmatprep.subr.mxu0 0.0
    %1157 = vmatpush1.msra.mxu0 0.0
    %1158 = vmatprep.subr.mxu0 0.0
    %1159 = vmatpush1.msra.mxu0 0.0
    %1160 = vmatprep.subr.mxu0 0.0
    %1161 = vmatpush1.msra.mxu0 0.0
    %1162 = vmatprep.subr.mxu0 0.0
    %1163 = vmatpush1.msra.mxu0 0.0
    %1164 = vmatprep.subr.mxu0 0.0
    %1165 = vmatpush1.msra.mxu0 0.0
    %1166 = vmatprep.mubr.f32.mxu0 0.0
    %1167 = vmatmul.mubr.f32.gmra.mrb[0].mxu0 %v1100
    %v1168 = vpop.f32.mrb[0].mxu0
    %v1169 = vadd.f32 0.0, %v1168
    %v1170 = vpop.f32.mrb[0].mxu0
    %1171 = vdwg.mxu0
    %1172 = vrot.lane.b32.xlu0 %v236, 48
    %v1173 = vpop.permute.xlu0 %1172
    %v1176 = vsel %vm260, %v1095, 0
    %1178 = vmatprep.subr.mxu0 0.0
    %1179 = vmatpush1.msra.mxu0 %v1173
    %1180 = vmatprep.subr.mxu0 0.0
    %1181 = vmatpush1.msra.mxu0 0.0
    %1182 = vmatprep.subr.mxu0 0.0
    %1183 = vmatpush1.msra.mxu0 0.0
    %1184 = vmatprep.subr.mxu0 0.0
    %1185 = vmatpush1.msra.mxu0 0.0
    %1186 = vmatprep.subr.mxu0 0.0
    %1187 = vmatpush1.msra.mxu0 0.0
    %1188 = vmatprep.subr.mxu0 0.0
    %1189 = vmatpush1.msra.mxu0 0.0
    %1190 = vmatprep.subr.mxu0 0.0
    %1191 = vmatpush1.msra.mxu0 0.0
    %1192 = vmatprep.subr.mxu0 0.0
    %1193 = vmatpush1.msra.mxu0 0.0
    %1194 = vmatprep.subr.mxu0 0.0
    %1195 = vmatpush1.msra.mxu0 0.0
    %1196 = vmatprep.subr.mxu0 0.0
    %1197 = vmatpush1.msra.mxu0 0.0
    %1198 = vmatprep.subr.mxu0 0.0
    %1199 = vmatpush1.msra.mxu0 0.0
    %1200 = vmatprep.subr.mxu0 0.0
    %1201 = vmatpush1.msra.mxu0 0.0
    %1202 = vmatprep.subr.mxu0 0.0
    %1203 = vmatpush1.msra.mxu0 0.0
    %1204 = vmatprep.subr.mxu0 0.0
    %1205 = vmatpush1.msra.mxu0 0.0
    %1206 = vmatprep.subr.mxu0 0.0
    %1207 = vmatpush1.msra.mxu0 0.0
    %1208 = vmatprep.subr.mxu0 0.0
    %1209 = vmatpush1.msra.mxu0 0.0
    %1210 = vmatprep.subr.mxu0 0.0
    %1211 = vmatpush1.msra.mxu0 0.0
    %1212 = vmatprep.subr.mxu0 0.0
    %1213 = vmatpush1.msra.mxu0 0.0
    %1214 = vmatprep.subr.mxu0 0.0
    %1215 = vmatpush1.msra.mxu0 0.0
    %1216 = vmatprep.subr.mxu0 0.0
    %1217 = vmatpush1.msra.mxu0 0.0
    %1218 = vmatprep.subr.mxu0 0.0
    %1219 = vmatpush1.msra.mxu0 0.0
    %1220 = vmatprep.subr.mxu0 0.0
    %1221 = vmatpush1.msra.mxu0 0.0
    %1222 = vmatprep.subr.mxu0 0.0
    %1223 = vmatpush1.msra.mxu0 0.0
    %1224 = vmatprep.subr.mxu0 0.0
    %1225 = vmatpush1.msra.mxu0 0.0
    %1226 = vmatprep.subr.mxu0 0.0
    %1227 = vmatpush1.msra.mxu0 0.0
    %1228 = vmatprep.subr.mxu0 0.0
    %1229 = vmatpush1.msra.mxu0 0.0
    %1230 = vmatprep.subr.mxu0 0.0
    %1231 = vmatpush1.msra.mxu0 0.0
    %1232 = vmatprep.subr.mxu0 0.0
    %1233 = vmatpush1.msra.mxu0 0.0
    %1234 = vmatprep.subr.mxu0 0.0
    %1235 = vmatpush1.msra.mxu0 0.0
    %1236 = vmatprep.subr.mxu0 0.0
    %1237 = vmatpush1.msra.mxu0 0.0
    %1238 = vmatprep.subr.mxu0 0.0
    %1239 = vmatpush1.msra.mxu0 0.0
    %1240 = vmatprep.subr.mxu0 0.0
    %1241 = vmatpush1.msra.mxu0 0.0
    %1242 = vmatprep.mubr.f32.mxu0 0.0
    %1243 = vmatmul.mubr.f32.gmra.mrb[0].mxu0 %v1176
    %v1244 = vpop.f32.mrb[0].mxu0
    %v1245 = vadd.f32 0.0, %v1244
    %v1246 = vpop.f32.mrb[0].mxu0
    %1247 = vdwg.mxu0
    %1248 = vrot.lane.b32.xlu0 %v239, 104
    %v1249 = vpop.permute.xlu0 %1248
    %1250 = vrot.lane.b32.xlu0 %v231, 72
    %v1251 = vpop.permute.xlu0 %1250
    %v1252 = vsel %vm260, %v1249, 0
    %v1254 = vsel %vm260, %v1251, 0
    %1256 = vmatprep.subr.mxu0 0.0
    %1257 = vmatpush1.xpose.msra.mxu0 %v1254
    %1258 = vmatprep.subr.mxu0 0.0
    %1259 = vmatpush1.xpose.msra.mxu0 0.0
    %1260 = vmatprep.subr.mxu0 0.0
    %1261 = vmatpush1.xpose.msra.mxu0 0.0
    %1262 = vmatprep.subr.mxu0 0.0
    %1263 = vmatpush1.xpose.msra.mxu0 0.0
    %1264 = vmatprep.subr.mxu0 0.0
    %1265 = vmatpush1.xpose.msra.mxu0 0.0
    %1266 = vmatprep.subr.mxu0 0.0
    %1267 = vmatpush1.xpose.msra.mxu0 0.0
    %1268 = vmatprep.subr.mxu0 0.0
    %1269 = vmatpush1.xpose.msra.mxu0 0.0
    %1270 = vmatprep.subr.mxu0 0.0
    %1271 = vmatpush1.xpose.msra.mxu0 0.0
    %1272 = vmatprep.subr.mxu0 0.0
    %1273 = vmatpush1.xpose.msra.mxu0 0.0
    %1274 = vmatprep.subr.mxu0 0.0
    %1275 = vmatpush1.xpose.msra.mxu0 0.0
    %1276 = vmatprep.subr.mxu0 0.0
    %1277 = vmatpush1.xpose.msra.mxu0 0.0
    %1278 = vmatprep.subr.mxu0 0.0
    %1279 = vmatpush1.xpose.msra.mxu0 0.0
    %1280 = vmatprep.subr.mxu0 0.0
    %1281 = vmatpush1.xpose.msra.mxu0 0.0
    %1282 = vmatprep.subr.mxu0 0.0
    %1283 = vmatpush1.xpose.msra.mxu0 0.0
    %1284 = vmatprep.subr.mxu0 0.0
    %1285 = vmatpush1.xpose.msra.mxu0 0.0
    %1286 = vmatprep.subr.mxu0 0.0
    %1287 = vmatpush1.xpose.msra.mxu0 0.0
    %1288 = vmatprep.subr.mxu0 0.0
    %1289 = vmatpush1.xpose.msra.mxu0 0.0
    %1290 = vmatprep.subr.mxu0 0.0
    %1291 = vmatpush1.xpose.msra.mxu0 0.0
    %1292 = vmatprep.subr.mxu0 0.0
    %1293 = vmatpush1.xpose.msra.mxu0 0.0
    %1294 = vmatprep.subr.mxu0 0.0
    %1295 = vmatpush1.xpose.msra.mxu0 0.0
    %1296 = vmatprep.subr.mxu0 0.0
    %1297 = vmatpush1.xpose.msra.mxu0 0.0
    %1298 = vmatprep.subr.mxu0 0.0
    %1299 = vmatpush1.xpose.msra.mxu0 0.0
    %1300 = vmatprep.subr.mxu0 0.0
    %1301 = vmatpush1.xpose.msra.mxu0 0.0
    %1302 = vmatprep.subr.mxu0 0.0
    %1303 = vmatpush1.xpose.msra.mxu0 0.0
    %1304 = vmatprep.subr.mxu0 0.0
    %1305 = vmatpush1.xpose.msra.mxu0 0.0
    %1306 = vmatprep.subr.mxu0 0.0
    %1307 = vmatpush1.xpose.msra.mxu0 0.0
    %1308 = vmatprep.subr.mxu0 0.0
    %1309 = vmatpush1.xpose.msra.mxu0 0.0
    %1310 = vmatprep.subr.mxu0 0.0
    %1311 = vmatpush1.xpose.msra.mxu0 0.0
    %1312 = vmatprep.subr.mxu0 0.0
    %1313 = vmatpush1.xpose.msra.mxu0 0.0
    %1314 = vmatprep.subr.mxu0 0.0
    %1315 = vmatpush1.xpose.msra.mxu0 0.0
    %1316 = vmatprep.subr.mxu0 0.0
    %1317 = vmatpush1.xpose.msra.mxu0 0.0
    %1318 = vmatprep.subr.mxu0 0.0
    %1319 = vmatpush1.xpose.msra.mxu0 0.0
    %1320 = vmatprep.mubr.f32.mxu0 0.0
    %1321 = vmatmul.mubr.f32.gmra.mrb[0].mxu0 %v1252
    %v1322 = vpop.f32.mrb[0].mxu0
    %v1323 = vadd.f32 %v250, %v1322
    %v1324 = vpop.f32.mrb[0].mxu0
    %1325 = vdwg.mxu0
    %1326 = vrot.lane.b32.xlu0 %v240, 104
    %v1327 = vpop.permute.xlu0 %1326
    %1328 = vrot.lane.b32.xlu0 %v236, 72
    %v1329 = vpop.permute.xlu0 %1328
    %v1330 = vsel %vm260, %v1327, 0
    %v1332 = vsel %vm260, %v1329, 0
    %1334 = vmatprep.subr.mxu0 0.0
    %1335 = vmatpush1.xpose.msra.mxu0 %v1332
    %1336 = vmatprep.subr.mxu0 0.0
    %1337 = vmatpush1.xpose.msra.mxu0 0.0
    %1338 = vmatprep.subr.mxu0 0.0
    %1339 = vmatpush1.xpose.msra.mxu0 0.0
    %1340 = vmatprep.subr.mxu0 0.0
    %1341 = vmatpush1.xpose.msra.mxu0 0.0
    %1342 = vmatprep.subr.mxu0 0.0
    %1343 = vmatpush1.xpose.msra.mxu0 0.0
    %1344 = vmatprep.subr.mxu0 0.0
    %1345 = vmatpush1.xpose.msra.mxu0 0.0
    %1346 = vmatprep.subr.mxu0 0.0
    %1347 = vmatpush1.xpose.msra.mxu0 0.0
    %1348 = vmatprep.subr.mxu0 0.0
    %1349 = vmatpush1.xpose.msra.mxu0 0.0
    %1350 = vmatprep.subr.mxu0 0.0
    %1351 = vmatpush1.xpose.msra.mxu0 0.0
    %1352 = vmatprep.subr.mxu0 0.0
    %1353 = vmatpush1.xpose.msra.mxu0 0.0
    %1354 = vmatprep.subr.mxu0 0.0
    %1355 = vmatpush1.xpose.msra.mxu0 0.0
    %1356 = vmatprep.subr.mxu0 0.0
    %1357 = vmatpush1.xpose.msra.mxu0 0.0
    %1358 = vmatprep.subr.mxu0 0.0
    %1359 = vmatpush1.xpose.msra.mxu0 0.0
    %1360 = vmatprep.subr.mxu0 0.0
    %1361 = vmatpush1.xpose.msra.mxu0 0.0
    %1362 = vmatprep.subr.mxu0 0.0
    %1363 = vmatpush1.xpose.msra.mxu0 0.0
    %1364 = vmatprep.subr.mxu0 0.0
    %1365 = vmatpush1.xpose.msra.mxu0 0.0
    %1366 = vmatprep.subr.mxu0 0.0
    %1367 = vmatpush1.xpose.msra.mxu0 0.0
    %1368 = vmatprep.subr.mxu0 0.0
    %1369 = vmatpush1.xpose.msra.mxu0 0.0
    %1370 = vmatprep.subr.mxu0 0.0
    %1371 = vmatpush1.xpose.msra.mxu0 0.0
    %1372 = vmatprep.subr.mxu0 0.0
    %1373 = vmatpush1.xpose.msra.mxu0 0.0
    %1374 = vmatprep.subr.mxu0 0.0
    %1375 = vmatpush1.xpose.msra.mxu0 0.0
    %1376 = vmatprep.subr.mxu0 0.0
    %1377 = vmatpush1.xpose.msra.mxu0 0.0
    %1378 = vmatprep.subr.mxu0 0.0
    %1379 = vmatpush1.xpose.msra.mxu0 0.0
    %1380 = vmatprep.subr.mxu0 0.0
    %1381 = vmatpush1.xpose.msra.mxu0 0.0
    %1382 = vmatprep.subr.mxu0 0.0
    %1383 = vmatpush1.xpose.msra.mxu0 0.0
    %1384 = vmatprep.subr.mxu0 0.0
    %1385 = vmatpush1.xpose.msra.mxu0 0.0
    %1386 = vmatprep.subr.mxu0 0.0
    %1387 = vmatpush1.xpose.msra.mxu0 0.0
    %1388 = vmatprep.subr.mxu0 0.0
    %1389 = vmatpush1.xpose.msra.mxu0 0.0
    %1390 = vmatprep.subr.mxu0 0.0
    %1391 = vmatpush1.xpose.msra.mxu0 0.0
    %1392 = vmatprep.subr.mxu0 0.0
    %1393 = vmatpush1.xpose.msra.mxu0 0.0
    %1394 = vmatprep.subr.mxu0 0.0
    %1395 = vmatpush1.xpose.msra.mxu0 0.0
    %1396 = vmatprep.subr.mxu0 0.0
    %1397 = vmatpush1.xpose.msra.mxu0 0.0
    %1398 = vmatprep.mubr.f32.mxu0 0.0
    %1399 = vmatmul.mubr.f32.gmra.mrb[0].mxu0 %v1330
    %v1400 = vpop.f32.mrb[0].mxu0
    %v1401 = vadd.f32 %v254, %v1400
    %v1402 = vpop.f32.mrb[0].mxu0
    %1403 = vdwg.mxu0
    %v1404 = vsel %vm260, %v1323, -inf
    %1405 = vmax.xlane.f32.xlu0 %v1404
    %v1406 = vpop.xlane.xlu0 %1405
    %v1407 = vsel %vm260, %v1401, -inf
    %1408 = vmax.xlane.f32.xlu0 %v1407
    %v1409 = vpop.xlane.xlu0 %1408
    %v1410 = vsub.f32 %v1323, %v1406
    %v1411 = vsub.f32 %v1401, %v1409
    %v1412 = vmul.f32 %v1410, 1.442695
    %v1413 = vpow.pop %v1412
    %v1414 = vmul.f32 %v1411, 1.442695
    %v1415 = vpow.pop %v1414
    %v1416 = vsel %vm260, %v1413, 0.0
    %1417 = vadd.xlane.f32.xlu0 %v1416
    %v1418 = vpop.xlane.xlu0 %1417
    %v1419 = vsel %vm260, %v1415, 0.0
    %1420 = vadd.xlane.f32.xlu0 %v1419
    %v1421 = vpop.xlane.xlu0 %1420
    %v1422 = vrcp.pop %v1418
    %v1423 = vrcp.pop %v1421
    %v1424 = vmul.f32 %v1413, %v1422
    %v1425 = vmul.f32 %v1415, %v1423
    %1426 = vrot.lane.b32.xlu0 %v231, 40
    %v1427 = vpop.permute.xlu0 %1426
    %v1430 = vsel %vm260, %v1424, 0
    %1432 = vmatprep.subr.mxu0 0.0
    %1433 = vmatpush1.msra.mxu0 %v1427
    %1434 = vmatprep.subr.mxu0 0.0
    %1435 = vmatpush1.msra.mxu0 0.0
    %1436 = vmatprep.subr.mxu0 0.0
    %1437 = vmatpush1.msra.mxu0 0.0
    %1438 = vmatprep.subr.mxu0 0.0
    %1439 = vmatpush1.msra.mxu0 0.0
    %1440 = vmatprep.subr.mxu0 0.0
    %1441 = vmatpush1.msra.mxu0 0.0
    %1442 = vmatprep.subr.mxu0 0.0
    %1443 = vmatpush1.msra.mxu0 0.0
    %1444 = vmatprep.subr.mxu0 0.0
    %1445 = vmatpush1.msra.mxu0 0.0
    %1446 = vmatprep.subr.mxu0 0.0
    %1447 = vmatpush1.msra.mxu0 0.0
    %1448 = vmatprep.subr.mxu0 0.0
    %1449 = vmatpush1.msra.mxu0 0.0
    %1450 = vmatprep.subr.mxu0 0.0
    %1451 = vmatpush1.msra.mxu0 0.0
    %1452 = vmatprep.subr.mxu0 0.0
    %1453 = vmatpush1.msra.mxu0 0.0
    %1454 = vmatprep.subr.mxu0 0.0
    %1455 = vmatpush1.msra.mxu0 0.0
    %1456 = vmatprep.subr.mxu0 0.0
    %1457 = vmatpush1.msra.mxu0 0.0
    %1458 = vmatprep.subr.mxu0 0.0
    %1459 = vmatpush1.msra.mxu0 0.0
    %1460 = vmatprep.subr.mxu0 0.0
    %1461 = vmatpush1.msra.mxu0 0.0
    %1462 = vmatprep.subr.mxu0 0.0
    %1463 = vmatpush1.msra.mxu0 0.0
    %1464 = vmatprep.subr.mxu0 0.0
    %1465 = vmatpush1.msra.mxu0 0.0
    %1466 = vmatprep.subr.mxu0 0.0
    %1467 = vmatpush1.msra.mxu0 0.0
    %1468 = vmatprep.subr.mxu0 0.0
    %1469 = vmatpush1.msra.mxu0 0.0
    %1470 = vmatprep.subr.mxu0 0.0
    %1471 = vmatpush1.msra.mxu0 0.0
    %1472 = vmatprep.subr.mxu0 0.0
    %1473 = vmatpush1.msra.mxu0 0.0
    %1474 = vmatprep.subr.mxu0 0.0
    %1475 = vmatpush1.msra.mxu0 0.0
    %1476 = vmatprep.subr.mxu0 0.0
    %1477 = vmatpush1.msra.mxu0 0.0
    %1478 = vmatprep.subr.mxu0 0.0
    %1479 = vmatpush1.msra.mxu0 0.0
    %1480 = vmatprep.subr.mxu0 0.0
    %1481 = vmatpush1.msra.mxu0 0.0
    %1482 = vmatprep.subr.mxu0 0.0
    %1483 = vmatpush1.msra.mxu0 0.0
    %1484 = vmatprep.subr.mxu0 0.0
    %1485 = vmatpush1.msra.mxu0 0.0
    %1486 = vmatprep.subr.mxu0 0.0
    %1487 = vmatpush1.msra.mxu0 0.0
    %1488 = vmatprep.subr.mxu0 0.0
    %1489 = vmatpush1.msra.mxu0 0.0
    %1490 = vmatprep.subr.mxu0 0.0
    %1491 = vmatpush1.msra.mxu0 0.0
    %1492 = vmatprep.subr.mxu0 0.0
    %1493 = vmatpush1.msra.mxu0 0.0
    %1494 = vmatprep.subr.mxu0 0.0
    %1495 = vmatpush1.msra.mxu0 0.0
    %1496 = vmatprep.mubr.f32.mxu0 0.0
    %1497 = vmatmul.mubr.f32.gmra.mrb[0].mxu0 %v1430
    %v1498 = vpop.f32.mrb[0].mxu0
    %v1499 = vadd.f32 0.0, %v1498
    %v1500 = vpop.f32.mrb[0].mxu0
    %1501 = vdwg.mxu0
    %1502 = vrot.lane.b32.xlu0 %v236, 40
    %v1503 = vpop.permute.xlu0 %1502
    %v1506 = vsel %vm260, %v1425, 0
    %1508 = vmatprep.subr.mxu0 0.0
    %1509 = vmatpush1.msra.mxu0 %v1503
    %1510 = vmatprep.subr.mxu0 0.0
    %1511 = vmatpush1.msra.mxu0 0.0
    %1512 = vmatprep.subr.mxu0 0.0
    %1513 = vmatpush1.msra.mxu0 0.0
    %1514 = vmatprep.subr.mxu0 0.0
    %1515 = vmatpush1.msra.mxu0 0.0
    %1516 = vmatprep.subr.mxu0 0.0
    %1517 = vmatpush1.msra.mxu0 0.0
    %1518 = vmatprep.subr.mxu0 0.0
    %1519 = vmatpush1.msra.mxu0 0.0
    %1520 = vmatprep.subr.mxu0 0.0
    %1521 = vmatpush1.msra.mxu0 0.0
    %1522 = vmatprep.subr.mxu0 0.0
    %1523 = vmatpush1.msra.mxu0 0.0
    %1524 = vmatprep.subr.mxu0 0.0
    %1525 = vmatpush1.msra.mxu0 0.0
    %1526 = vmatprep.subr.mxu0 0.0
    %1527 = vmatpush1.msra.mxu0 0.0
    %1528 = vmatprep.subr.mxu0 0.0
    %1529 = vmatpush1.msra.mxu0 0.0
    %1530 = vmatprep.subr.mxu0 0.0
    %1531 = vmatpush1.msra.mxu0 0.0
    %1532 = vmatprep.subr.mxu0 0.0
    %1533 = vmatpush1.msra.mxu0 0.0
    %1534 = vmatprep.subr.mxu0 0.0
    %1535 = vmatpush1.msra.mxu0 0.0
    %1536 = vmatprep.subr.mxu0 0.0
    %1537 = vmatpush1.msra.mxu0 0.0
    %1538 = vmatprep.subr.mxu0 0.0
    %1539 = vmatpush1.msra.mxu0 0.0
    %1540 = vmatprep.subr.mxu0 0.0
    %1541 = vmatpush1.msra.mxu0 0.0
    %1542 = vmatprep.subr.mxu0 0.0
    %1543 = vmatpush1.msra.mxu0 0.0
    %1544 = vmatprep.subr.mxu0 0.0
    %1545 = vmatpush1.msra.mxu0 0.0
    %1546 = vmatprep.subr.mxu0 0.0
    %1547 = vmatpush1.msra.mxu0 0.0
    %1548 = vmatprep.subr.mxu0 0.0
    %1549 = vmatpush1.msra.mxu0 0.0
    %1550 = vmatprep.subr.mxu0 0.0
    %1551 = vmatpush1.msra.mxu0 0.0
    %1552 = vmatprep.subr.mxu0 0.0
    %1553 = vmatpush1.msra.mxu0 0.0
    %1554 = vmatprep.subr.mxu0 0.0
    %1555 = vmatpush1.msra.mxu0 0.0
    %1556 = vmatprep.subr.mxu0 0.0
    %1557 = vmatpush1.msra.mxu0 0.0
    %1558 = vmatprep.subr.mxu0 0.0
    %1559 = vmatpush1.msra.mxu0 0.0
    %1560 = vmatprep.subr.mxu0 0.0
    %1561 = vmatpush1.msra.mxu0 0.0
    %1562 = vmatprep.subr.mxu0 0.0
    %1563 = vmatpush1.msra.mxu0 0.0
    %1564 = vmatprep.subr.mxu0 0.0
    %1565 = vmatpush1.msra.mxu0 0.0
    %1566 = vmatprep.subr.mxu0 0.0
    %1567 = vmatpush1.msra.mxu0 0.0
    %1568 = vmatprep.subr.mxu0 0.0
    %1569 = vmatpush1.msra.mxu0 0.0
    %1570 = vmatprep.subr.mxu0 0.0
    %1571 = vmatpush1.msra.mxu0 0.0
    %1572 = vmatprep.mubr.f32.mxu0 0.0
    %1573 = vmatmul.mubr.f32.gmra.mrb[0].mxu0 %v1506
    %v1574 = vpop.f32.mrb[0].mxu0
    %v1575 = vadd.f32 0.0, %v1574
    %v1576 = vpop.f32.mrb[0].mxu0
    %1577 = vdwg.mxu0
    %1580 = vrot.lane.b32.xlu0 %v839, 8
    %v1581 = vpop.permute.xlu0 %1580
    %1582 = vrot.lane.b32.xlu0 %v915, 8
    %v1583 = vpop.permute.xlu0 %1582
    %1588 = vrot.lane.b32.xlu0 %v1169, 16
    %v1589 = vpop.permute.xlu0 %1588
    %1590 = vrot.lane.b32.xlu0 %v1245, 16
    %v1591 = vpop.permute.xlu0 %1590
    %1596 = vrot.lane.b32.xlu0 %v1499, 24
    %v1597 = vpop.permute.xlu0 %1596
    %1598 = vrot.lane.b32.xlu0 %v1575, 24
    %v1599 = vpop.permute.xlu0 %1598
    %v1602 = vsel %vm260, %v509, %v1581
    %v1603 = vsel %vm260, %v585, %v1583
    %vm1604 = vcmask 130048
    %v1605 = vsel %vm1604, %v1602, %v1589
    %v1606 = vsel %vm1604, %v1603, %v1591
    %vm1607 = vcmask 195584
    %v1608 = vsel %vm1607, %v1605, %v1597
    %v1609 = vsel %vm1607, %v1606, %v1599
    %v1610 = vld [vmem:[%s5] sm:$0xff]
    %v1611 = vld [vmem:[%s5 + $0x8] sm:$0xff]
    %v1612 = vld [vmem:[%s5 + $0x10] sm:$0xff]
    %v1613 = vld [vmem:[%s5 + $0x18] sm:$0xff]
    %v1614 = vld [vmem:[#allocation8] sm:$0x1]
    %v1616 = vlaneseq
    %v1617 = vshrl.u32 %v1616, 7
    %v1618 = vsub.s32 0, %v1617
    %v1619 = vrot.slane %v1614, %v1618
    %v1622 = vsel %vm107, %v1608, 0
    %v1625 = vsel %vm107, %v1609, 0
    %1627 = vmatprep.subr.mxu0 0.0
    %1628 = vmatpush1.msra.mxu0 %v1610
    %1629 = vmatprep.subr.mxu0 0.0
    %1630 = vmatpush1.msra.mxu0 %v1611
    %1631 = vmatprep.subr.mxu0 0.0
    %1632 = vmatpush1.msra.mxu0 %v1612
    %1633 = vmatprep.subr.mxu0 0.0
    %1634 = vmatpush1.msra.mxu0 %v1613
    %1635 = vmatprep.subr.mxu0 0.0
    %1636 = vmatpush1.msra.mxu0 0.0
    %1637 = vmatprep.subr.mxu0 0.0
    %1638 = vmatpush1.msra.mxu0 0.0
    %1639 = vmatprep.subr.mxu0 0.0
    %1640 = vmatpush1.msra.mxu0 0.0
    %1641 = vmatprep.subr.mxu0 0.0
    %1642 = vmatpush1.msra.mxu0 0.0
    %1643 = vmatprep.subr.mxu0 0.0
    %1644 = vmatpush1.msra.mxu0 0.0
    %1645 = vmatprep.subr.mxu0 0.0
    %1646 = vmatpush1.msra.mxu0 0.0
    %1647 = vmatprep.subr.mxu0 0.0
    %1648 = vmatpush1.msra.mxu0 0.0
    %1649 = vmatprep.subr.mxu0 0.0
    %1650 = vmatpush1.msra.mxu0 0.0
    %1651 = vmatprep.subr.mxu0 0.0
    %1652 = vmatpush1.msra.mxu0 0.0
    %1653 = vmatprep.subr.mxu0 0.0
    %1654 = vmatpush1.msra.mxu0 0.0
    %1655 = vmatprep.subr.mxu0 0.0
    %1656 = vmatpush1.msra.mxu0 0.0
    %1657 = vmatprep.subr.mxu0 0.0
    %1658 = vmatpush1.msra.mxu0 0.0
    %1659 = vmatprep.subr.mxu0 0.0
    %1660 = vmatpush1.msra.mxu0 0.0
    %1661 = vmatprep.subr.mxu0 0.0
    %1662 = vmatpush1.msra.mxu0 0.0
    %1663 = vmatprep.subr.mxu0 0.0
    %1664 = vmatpush1.msra.mxu0 0.0
    %1665 = vmatprep.subr.mxu0 0.0
    %1666 = vmatpush1.msra.mxu0 0.0
    %1667 = vmatprep.subr.mxu0 0.0
    %1668 = vmatpush1.msra.mxu0 0.0
    %1669 = vmatprep.subr.mxu0 0.0
    %1670 = vmatpush1.msra.mxu0 0.0
    %1671 = vmatprep.subr.mxu0 0.0
    %1672 = vmatpush1.msra.mxu0 0.0
    %1673 = vmatprep.subr.mxu0 0.0
    %1674 = vmatpush1.msra.mxu0 0.0
    %1675 = vmatprep.subr.mxu0 0.0
    %1676 = vmatpush1.msra.mxu0 0.0
    %1677 = vmatprep.subr.mxu0 0.0
    %1678 = vmatpush1.msra.mxu0 0.0
    %1679 = vmatprep.subr.mxu0 0.0
    %1680 = vmatpush1.msra.mxu0 0.0
    %1681 = vmatprep.subr.mxu0 0.0
    %1682 = vmatpush1.msra.mxu0 0.0
    %1683 = vmatprep.subr.mxu0 0.0
    %1684 = vmatpush1.msra.mxu0 0.0
    %1685 = vmatprep.subr.mxu0 0.0
    %1686 = vmatpush1.msra.mxu0 0.0
    %1687 = vmatprep.subr.mxu0 0.0
    %1688 = vmatpush1.msra.mxu0 0.0
    %1689 = vmatprep.subr.mxu0 0.0
    %1690 = vmatpush1.msra.mxu0 0.0
    %1691 = vmatprep.mubr.f32.mxu0 0.0
    %1692 = vmatmul.mubr.f32.gmra.mrb[0].mxu0 %v1622
    %v1693 = vpop.f32.mrb[0].mxu0
    %v1694 = vadd.f32 %v1619, %v1693
    %v1695 = vpop.f32.mrb[0].mxu0
    %1696 = vmatprep.mubr.f32.mxu0 0.0
    %1697 = vmatmul.mubr.f32.gmra.mrb[0].mxu0 %v1625
    %v1698 = vpop.f32.mrb[0].mxu0
    %v1699 = vadd.f32 %v1619, %v1698
    %v1700 = vpop.f32.mrb[0].mxu0
    %1701 = vdwg.mxu0
    %v1702 = vadd.f32 %v102, %v1694
    %v1703 = vadd.f32 %v103, %v1699
    %v1704 = vsel %vm107, %v1702, 0.0
    %1705 = vadd.xlane.f32.xlu0 %v1704
    %v1706 = vpop.xlane.xlu0 %1705
    %v1707 = vsel %vm107, %v1703, 0.0
    %1708 = vadd.xlane.f32.xlu0 %v1707
    %v1709 = vpop.xlane.xlu0 %1708
    %v1710 = vmul.f32 %v1706, %v114
    %v1711 = vmul.f32 %v1709, %v114
    %v1712 = vsub.f32 %v1702, %v1710
    %v1713 = vsub.f32 %v1703, %v1711
    %v1714 = vmul.f32 %v1712, %v1712
    %v1715 = vmul.f32 %v1713, %v1713
    %v1716 = vsel %vm107, %v1714, 0.0
    %1717 = vadd.xlane.f32.xlu0 %v1716
    %v1718 = vpop.xlane.xlu0 %1717
    %v1719 = vsel %vm107, %v1715, 0.0
    %1720 = vadd.xlane.f32.xlu0 %v1719
    %v1721 = vpop.xlane.xlu0 %1720
    %v1722 = vmul.f32 %v1718, %v114
    %v1723 = vmul.f32 %v1721, %v114
    %v1724 = vadd.f32 %v1722, 1e-05
    %v1725 = vadd.f32 %v1723, 1e-05
    %v1726 = vrsqrt.pop %v1724
    %v1727 = vrsqrt.pop %v1725
    %v1728 = vmul.f32 %v1712, %v1726
    %v1729 = vmul.f32 %v1713, %v1727
    %v1730 = vlaneseq
    %v1731 = vshrl.u32 %v1730, 7
    %v1732 = vsub.s32 2, %v1731
    %v1733 = vrot.slane %v106, %v1732
    %v1734 = vmul.f32 %v1728, %v1733
    %v1735 = vmul.f32 %v1729, %v1733
    %v1736 = vlaneseq
    %v1737 = vshrl.u32 %v1736, 7
    %v1738 = vsub.s32 3, %v1737
    %v1739 = vrot.slane %v106, %v1738
    %v1740 = vadd.f32 %v1734, %v1739
    %v1741 = vadd.f32 %v1735, %v1739
    %v1742 = vld [vmem:[%s7] sm:$0xff]
    %v1743 = vld [vmem:[%s7 + $0x8] sm:$0xff]
    %v1744 = vld [vmem:[%s7 + $0x10] sm:$0xff]
    %v1745 = vld [vmem:[%s7 + $0x18] sm:$0xff]
    %v1746 = vld [vmem:[#allocation10] sm:$0x1]
    %v1748 = vlaneseq
    %v1749 = vshrl.u32 %v1748, 7
    %v1750 = vsub.s32 0, %v1749
    %v1751 = vrot.slane %v1746, %v1750
    %v1754 = vsel %vm107, %v1740, 0
    %v1757 = vsel %vm107, %v1741, 0
    %1759 = vmatprep.subr.mxu0 0.0
    %1760 = vmatpush1.msra.mxu0 %v1742
    %1761 = vmatprep.subr.mxu0 0.0
    %1762 = vmatpush1.msra.mxu0 %v1743
    %1763 = vmatprep.subr.mxu0 0.0
    %1764 = vmatpush1.msra.mxu0 %v1744
    %1765 = vmatprep.subr.mxu0 0.0
    %1766 = vmatpush1.msra.mxu0 %v1745
    %1767 = vmatprep.subr.mxu0 0.0
    %1768 = vmatpush1.msra.mxu0 0.0
    %1769 = vmatprep.subr.mxu0 0.0
    %1770 = vmatpush1.msra.mxu0 0.0
    %1771 = vmatprep.subr.mxu0 0.0
    %1772 = vmatpush1.msra.mxu0 0.0
    %1773 = vmatprep.subr.mxu0 0.0
    %1774 = vmatpush1.msra.mxu0 0.0
    %1775 = vmatprep.subr.mxu0 0.0
    %1776 = vmatpush1.msra.mxu0 0.0
    %1777 = vmatprep.subr.mxu0 0.0
    %1778 = vmatpush1.msra.mxu0 0.0
    %1779 = vmatprep.subr.mxu0 0.0
    %1780 = vmatpush1.msra.mxu0 0.0
    %1781 = vmatprep.subr.mxu0 0.0
    %1782 = vmatpush1.msra.mxu0 0.0
    %1783 = vmatprep.subr.mxu0 0.0
    %1784 = vmatpush1.msra.mxu0 0.0
    %1785 = vmatprep.subr.mxu0 0.0
    %1786 = vmatpush1.msra.mxu0 0.0
    %1787 = vmatprep.subr.mxu0 0.0
    %1788 = vmatpush1.msra.mxu0 0.0
    %1789 = vmatprep.subr.mxu0 0.0
    %1790 = vmatpush1.msra.mxu0 0.0
    %1791 = vmatprep.subr.mxu0 0.0
    %1792 = vmatpush1.msra.mxu0 0.0
    %1793 = vmatprep.subr.mxu0 0.0
    %1794 = vmatpush1.msra.mxu0 0.0
    %1795 = vmatprep.subr.mxu0 0.0
    %1796 = vmatpush1.msra.mxu0 0.0
    %1797 = vmatprep.subr.mxu0 0.0
    %1798 = vmatpush1.msra.mxu0 0.0
    %1799 = vmatprep.subr.mxu0 0.0
    %1800 = vmatpush1.msra.mxu0 0.0
    %1801 = vmatprep.subr.mxu0 0.0
    %1802 = vmatpush1.msra.mxu0 0.0
    %1803 = vmatprep.subr.mxu0 0.0
    %1804 = vmatpush1.msra.mxu0 0.0
    %1805 = vmatprep.subr.mxu0 0.0
    %1806 = vmatpush1.msra.mxu0 0.0
    %1807 = vmatprep.subr.mxu0 0.0
    %1808 = vmatpush1.msra.mxu0 0.0
    %1809 = vmatprep.subr.mxu0 0.0
    %1810 = vmatpush1.msra.mxu0 0.0
    %1811 = vmatprep.subr.mxu0 0.0
    %1812 = vmatpush1.msra.mxu0 0.0
    %1813 = vmatprep.subr.mxu0 0.0
    %1814 = vmatpush1.msra.mxu0 0.0
    %1815 = vmatprep.subr.mxu0 0.0
    %1816 = vmatpush1.msra.mxu0 0.0
    %1817 = vmatprep.subr.mxu0 0.0
    %1818 = vmatpush1.msra.mxu0 0.0
    %1819 = vmatprep.subr.mxu0 0.0
    %1820 = vmatpush1.msra.mxu0 0.0
    %1821 = vmatprep.subr.mxu0 0.0
    %1822 = vmatpush1.msra.mxu0 0.0
    %1823 = vmatprep.mubr.f32.mxu0 0.0
    %1824 = vmatmul.mubr.f32.gmra.mrb[0].mxu0 %v1754
    %v1825 = vpop.f32.mrb[0].mxu0
    %v1826 = vadd.f32 %v1751, %v1825
    %v1827 = vpop.f32.mrb[0].mxu0
    %1828 = vmatprep.mubr.f32.mxu0 0.0
    %1829 = vmatmul.mubr.f32.gmra.mrb[0].mxu0 %v1757
    %v1830 = vpop.f32.mrb[0].mxu0
    %v1831 = vadd.f32 %v1751, %v1830
    %v1832 = vpop.f32.mrb[0].mxu0
    %1833 = vdwg.mxu0
    %v1834 = vmax.f32 %v1826, 0.0
    %v1835 = vmax.f32 %v1831, 0.0
    %v1836 = vld [vmem:[%s9] sm:$0xff]
    %v1837 = vld [vmem:[%s9 + $0x8] sm:$0xff]
    %v1838 = vld [vmem:[%s9 + $0x10] sm:$0xff]
    %v1839 = vld [vmem:[%s9 + $0x18] sm:$0xff]
    %v1840 = vld [vmem:[%s9 + $0x20] sm:$0xff]
    %v1841 = vld [vmem:[%s9 + $0x28] sm:$0xff]
    %v1842 = vld [vmem:[%s9 + $0x30] sm:$0xff]
    %v1843 = vld [vmem:[%s9 + $0x38] sm:$0xff]
    %v1844 = vld [vmem:[%s10] sm:$0x1]
    %v1846 = vlaneseq
    %v1847 = vshrl.u32 %v1846, 7
    %v1848 = vsub.s32 0, %v1847
    %v1849 = vrot.slane %v1844, %v1848
    %vm1851 = vcmask 523264
    %v1853 = vsel %vm1851, %v1834, 0
    %v1856 = vsel %vm1851, %v1835, 0
    %1858 = vmatprep.subr.mxu0 0.0
    %1859 = vmatpush1.msra.mxu0 %v1836
    %1860 = vmatprep.subr.mxu0 0.0
    %1861 = vmatpush1.msra.mxu0 %v1837
    %1862 = vmatprep.subr.mxu0 0.0
    %1863 = vmatpush1.msra.mxu0 %v1838
    %1864 = vmatprep.subr.mxu0 0.0
    %1865 = vmatpush1.msra.mxu0 %v1839
    %1866 = vmatprep.subr.mxu0 0.0
    %1867 = vmatpush1.msra.mxu0 %v1840
    %1868 = vmatprep.subr.mxu0 0.0
    %1869 = vmatpush1.msra.mxu0 %v1841
    %1870 = vmatprep.subr.mxu0 0.0
    %1871 = vmatpush1.msra.mxu0 %v1842
    %1872 = vmatprep.subr.mxu0 0.0
    %1873 = vmatpush1.msra.mxu0 %v1843
    %1874 = vmatprep.subr.mxu0 0.0
    %1875 = vmatpush1.msra.mxu0 0.0
    %1876 = vmatprep.subr.mxu0 0.0
    %1877 = vmatpush1.msra.mxu0 0.0
    %1878 = vmatprep.subr.mxu0 0.0
    %1879 = vmatpush1.msra.mxu0 0.0
    %1880 = vmatprep.subr.mxu0 0.0
    %1881 = vmatpush1.msra.mxu0 0.0
    %1882 = vmatprep.subr.mxu0 0.0
    %1883 = vmatpush1.msra.mxu0 0.0
    %1884 = vmatprep.subr.mxu0 0.0
    %1885 = vmatpush1.msra.mxu0 0.0
    %1886 = vmatprep.subr.mxu0 0.0
    %1887 = vmatpush1.msra.mxu0 0.0
    %1888 = vmatprep.subr.mxu0 0.0
    %1889 = vmatpush1.msra.mxu0 0.0
    %1890 = vmatprep.subr.mxu0 0.0
    %1891 = vmatpush1.msra.mxu0 0.0
    %1892 = vmatprep.subr.mxu0 0.0
    %1893 = vmatpush1.msra.mxu0 0.0
    %1894 = vmatprep.subr.mxu0 0.0
    %1895 = vmatpush1.msra.mxu0 0.0
    %1896 = vmatprep.subr.mxu0 0.0
    %1897 = vmatpush1.msra.mxu0 0.0
    %1898 = vmatprep.subr.mxu0 0.0
    %1899 = vmatpush1.msra.mxu0 0.0
    %1900 = vmatprep.subr.mxu0 0.0
    %1901 = vmatpush1.msra.mxu0 0.0
    %1902 = vmatprep.subr.mxu0 0.0
    %1903 = vmatpush1.msra.mxu0 0.0
    %1904 = vmatprep.subr.mxu0 0.0
    %1905 = vmatpush1.msra.mxu0 0.0
    %1906 = vmatprep.subr.mxu0 0.0
    %1907 = vmatpush1.msra.mxu0 0.0
    %1908 = vmatprep.subr.mxu0 0.0
    %1909 = vmatpush1.msra.mxu0 0.0
    %1910 = vmatprep.subr.mxu0 0.0
    %1911 = vmatpush1.msra.mxu0 0.0
    %1912 = vmatprep.subr.mxu0 0.0
    %1913 = vmatpush1.msra.mxu0 0.0
    %1914 = vmatprep.subr.mxu0 0.0
    %1915 = vmatpush1.msra.mxu0 0.0
    %1916 = vmatprep.subr.mxu0 0.0
    %1917 = vmatpush1.msra.mxu0 0.0
    %1918 = vmatprep.subr.mxu0 0.0
    %1919 = vmatpush1.msra.mxu0 0.0
    %1920 = vmatprep.subr.mxu0 0.0
    %1921 = vmatpush1.msra.mxu0 0.0
    %1922 = vmatprep.mubr.f32.mxu0 0.0
    %1923 = vmatmul.mubr.f32.gmra.mrb[0].mxu0 %v1853
    %v1924 = vpop.f32.mrb[0].mxu0
    %v1925 = vadd.f32 %v1849, %v1924
    %v1926 = vpop.f32.mrb[0].mxu0
    %1927 = vmatprep.mubr.f32.mxu0 0.0
    %1928 = vmatmul.mubr.f32.gmra.mrb[0].mxu0 %v1856
    %v1929 = vpop.f32.mrb[0].mxu0
    %v1930 = vadd.f32 %v1849, %v1929
    %v1931 = vpop.f32.mrb[0].mxu0
    %1932 = vdwg.mxu0
    %v1933 = vadd.f32 %v1702, %v1925
    %v1934 = vadd.f32 %v1703, %v1930
    %1935 = vst.msk [vmem:[#allocation11] sm:$0xff] %vm107, %v1933
    %1936 = vst.msk [vmem:[#allocation11 + $0x8] sm:$0xff] %vm107, %v1934
    %1937 = vrot.lane.b32.xlu0 %v764, 8
    %v1938 = vpop.permute.xlu0 %1937
    %1939 = vrot.lane.b32.xlu0 %v765, 8
    %v1940 = vpop.permute.xlu0 %1939
    %1943 = vrot.lane.b32.xlu0 %v1094, 16
    %v1944 = vpop.permute.xlu0 %1943
    %1945 = vrot.lane.b32.xlu0 %v1095, 16
    %v1946 = vpop.permute.xlu0 %1945
    %1949 = vrot.lane.b32.xlu0 %v1424, 24
    %v1950 = vpop.permute.xlu0 %1949
    %1951 = vrot.lane.b32.xlu0 %v1425, 24
    %v1952 = vpop.permute.xlu0 %1951
    %v1955 = vsel %vm260, %v434, %v1938
    %v1956 = vsel %vm260, %v435, %v1940
    %v1957 = vsel %vm1604, %v1955, %v1944
    %v1958 = vsel %vm1604, %v1956, %v1946
    %v1959 = vsel %vm1607, %v1957, %v1950
    %v1960 = vsel %vm1607, %v1958, %v1952
    %1961 = vst.msk [vmem:[#allocation12] sm:$0xff] %vm107, %v1959
    %1962 = vst.msk [vmem:[#allocation12 + $0x8] sm:$0xff] %vm107, %v1960
    // Predicated region
    $region66: #{tpu_custom_call.1} parent=1 // pred_check
      _
    $region67: #{tpu_custom_call.1} parent=1 // pred_check_branch
      %1964 = sbr.rel (0) target = $region69
    $region68: #{tpu_custom_call.1} parent=1 // pred_region
      %s1966 = ssub.s32 256, 256
      %1967 = vsyncadd [#allocation4], %s1966
      %s1968 = sshll.u32 [#allocation11], 4
      %s1969 = int_to_ptr.vmem [resolvable:$true] %s1968
      %1974 = dma.vmem_to_hbm [thread:$0]  %s1969, 256, %s11, [#allocation4], 128, 128, 8
    $region69: #{tpu_custom_call.1} parent=1 // pred_fallthru
      _
    // Predicated region
    $region70: #{tpu_custom_call.1} parent=1 // pred_check
      _
    $region71: #{tpu_custom_call.1} parent=1 // pred_check_branch
      %1976 = sbr.rel (0) target = $region73
    $region72: #{tpu_custom_call.1} parent=1 // pred_region
      %s1978 = ssub.s32 256, 256
      %1979 = vsyncadd [#allocation13], %s1978
      %s1980 = sshll.u32 [#allocation12], 4
      %s1981 = int_to_ptr.vmem [resolvable:$true] %s1980
      %1986 = dma.vmem_to_hbm [thread:$0]  %s1981, 256, %s12, [#allocation13], 128, 128, 8
    $region73: #{tpu_custom_call.1} parent=1 // pred_fallthru
      _
    // Predicated region
    $region74: #{tpu_custom_call.1} parent=1 // pred_check
      _
    $region75: #{tpu_custom_call.1} parent=1 // pred_check_branch
      %1988 = sbr.rel (0) target = $region77
    $region76: #{tpu_custom_call.1} parent=1 // pred_region
      %1989 = dma.done [#allocation4], 256
    $region77: #{tpu_custom_call.1} parent=1 // pred_fallthru
      _
    // Predicated region
    $region78: #{tpu_custom_call.1} parent=1 // pred_check
      _
    $region79: #{tpu_custom_call.1} parent=1 // pred_check_branch
      %1991 = sbr.rel (0) target = $region81
    $region80: #{tpu_custom_call.1} parent=1 // pred_region
      %1992 = dma.done [#allocation13], 256
    $region81: #{tpu_custom_call.1} parent=1 // pred_fallthru
      _
    %1993 = vsyncpa [#allocation3], 1
    %1994 = vsyncpa [#allocation6], 1
    %1995 = vsyncpa [#allocation9], 1
    %1996 = vsyncpa [#allocation4], 1
    %1997 = vsyncpa [#allocation13], 1

</llo_original>
